<compile_context>
chip_gen: v7x
topology: tpu7x:2x2x1
jax: 0.10.0
libtpu: 0.0.40
codegen_flags: <defaults>
</compile_context>

<pallas_src>
import math
from functools import reduce

import jax
import jax.numpy as jnp
from jax.experimental import pallas as pl
from jax.experimental.pallas import tpu as pltpu

LANE = 128


def _round_up(n, m):
    return ((n + m - 1) // m) * m


def mlp_kernel(x_ref,
               w1_ref, b1_ref,
               w2_ref, b2_ref,
               w3_ref, b3_ref,
               w4_ref, b4_ref,
               o_ref):
    """Fused 4-layer MLP forward for one batch tile.

    x_ref: (TM, input_size) f32 — cast to bf16 here (not in the wrapper) so x
    is read from HBM exactly once.  Weights bf16 (in, out), zero-padded to
    128-lane widths; biases f32 (1, 128-multiple).  Dots accumulate in f32 on
    the MXU; bias add / ReLU stay f32 (v5e VPU has no bf16).
    """
    x = x_ref[...].astype(jnp.bfloat16)

    h = jnp.dot(x, w1_ref[...], preferred_element_type=jnp.float32) + b1_ref[...]
    h = jnp.maximum(h, 0.0)

    h = jnp.dot(h.astype(jnp.bfloat16), w2_ref[...],
                preferred_element_type=jnp.float32) + b2_ref[...]
    h = jnp.maximum(h, 0.0)

    h = jnp.dot(h.astype(jnp.bfloat16), w3_ref[...],
                preferred_element_type=jnp.float32) + b3_ref[...]
    h = jnp.maximum(h, 0.0)

    # f32 output store kept (bf16 store would save ~4-8% bytes but costs output
    # precision); padded class columns are exactly zero and sliced off outside.
    o_ref[...] = (jnp.dot(h.astype(jnp.bfloat16), w4_ref[...],
                          preferred_element_type=jnp.float32)
                  + b4_ref[...]).astype(o_ref.dtype)


def init_linear(key, in_features, out_features):
    """PyTorch nn.Linear default init, stored as (in, out) for x @ W."""
    kw, kb = jax.random.split(key)
    bound = 1.0 / math.sqrt(in_features)
    w = jax.random.uniform(kw, (in_features, out_features),
                           minval=-bound, maxval=bound, dtype=jnp.float32)
    b = jax.random.uniform(kb, (1, out_features),
                           minval=-bound, maxval=bound, dtype=jnp.float32)
    # bf16 weights (MXU-native, half the HBM bytes); f32 biases.
    return w.astype(jnp.bfloat16), b


def make_base_model_params(key, input_size, hidden_dim, n_classes):
    k1, k2, k3, k4 = jax.random.split(key, 4)
    dims = [(input_size, hidden_dim * 2),
            (hidden_dim * 2, hidden_dim),
            (hidden_dim, hidden_dim // 2),
            (hidden_dim // 2, n_classes)]
    params = []
    for k, (din, dout) in zip((k1, k2, k3, k4), dims):
        params.extend(init_linear(k, din, dout))
    return tuple(params)  # (w1, b1, w2, b2, w3, b3, w4, b4)


def _prep_padded_params(params, input_size):
    """Zero-pad every hidden/output width to a 128-lane multiple.

    Padded output lanes carry zero weight + zero bias, so relu(0)=0 propagates
    exactly and the extra columns never affect real outputs.  The input feature
    dim of layer k>1 is padded to match the previous layer's padded width; the
    x feature dim itself is never padded (no extra HBM pass over x).
    """
    w1, b1, w2, b2, w3, b3, w4, b4 = params
    prev = input_size
    padded = []
    for w, b in ((w1, b1), (w2, b2), (w3, b3), (w4, b4)):
        din, dout = w.shape
        doutp = _round_up(dout, LANE)
        wp = jnp.pad(w, ((0, prev - din), (0, doutp - dout)))
        bp = jnp.pad(b, ((0, 0), (0, doutp - dout)))
        padded.extend([wp, bp])
        prev = doutp
    return tuple(padded), prev  # prev == padded n_classes width


def base_model_forward(x_nchw, params, input_size, n_classes, *, tm=512):
    """Forward pass matching BaseModel.forward: view(-1, input_size) then MLP."""
    # Glue: flatten NCHW -> (B, input_size), same element order as torch .view.
    # Metadata-only reshape, NO dtype cast here (f32 streams into the kernel).
    x2d = x_nchw.reshape(-1, input_size)
    batch = x2d.shape[0]

    (w1, b1, w2, b2, w3, b3, w4, b4), n_out = _prep_padded_params(params, input_size)

    # Batch tile: large (512) for HBM-roofline efficiency, shrunk so the grid
    # has >=2 "parallel" steps when possible (v7x megacore), 8-row aligned
    # (f32 sublane granule).  No batch padding: grid = cdiv(batch, tm) and
    # Pallas masks the ragged last tile; rows are independent (no in-kernel
    # batch reduction) and the wrapper never reads beyond [:batch].
    if batch > 8:
        tm = min(tm, _round_up(pl.cdiv(batch, 2), 8))
    else:
        tm = batch  # tiny batch: single full-extent block
    grid = (pl.cdiv(batch, tm),)

    def const_spec(shape):
        # Constant index_map -> fetched once, stays VMEM-resident across steps;
        # single-buffered (no double buffer for blocks that never change).
        return pl.BlockSpec(shape, lambda i: (0, 0), pipeline_mode=pl.Buffered(1))

    in_specs = [
        pl.BlockSpec((tm, input_size), lambda i: (i, 0)),   # f32 x tile
        const_spec(w1.shape), const_spec(b1.shape),
        const_spec(w2.shape), const_spec(b2.shape),
        const_spec(w3.shape), const_spec(b3.shape),
        const_spec(w4.shape), const_spec(b4.shape),
    ]
    out_specs = pl.BlockSpec((tm, n_out), lambda i: (i, 0))

    # Honest cost estimate (padded matmul dims, f32 input, no batch padding).
    flops = 2 * batch * (input_size * w1.shape[1]
                         + w2.shape[0] * w2.shape[1]
                         + w3.shape[0] * w3.shape[1]
                         + w4.shape[0] * w4.shape[1])
    bytes_accessed = (batch * input_size * 4                          # f32 x (dominant)
                      + (w1.size + w2.size + w3.size + w4.size) * 2   # bf16 weights
                      + (b1.size + b2.size + b3.size + b4.size) * 4   # f32 biases
                      + batch * n_out * 4)                            # f32 out

    out_padded = pl.pallas_call(
        mlp_kernel,
        out_shape=jax.ShapeDtypeStruct((batch, n_out), jnp.float32),
        grid=grid,
        in_specs=in_specs,
        out_specs=out_specs,
        compiler_params=pltpu.CompilerParams(
            dimension_semantics=("parallel",),
            # TM=512 f32 x tile = 6 MiB x 2 buffers + out tiles + single-buffered
            # weights ~= 14 MiB; 48 MiB leaves headroom, stays under v7x's
            # 64 MiB/TC and well inside v5e/v6e's 128 MiB physical VMEM.
            vmem_limit_bytes=48 * 1024 * 1024,
        ),
        cost_estimate=pl.CostEstimate(flops=flops,
                                      transcendentals=0,
                                      bytes_accessed=bytes_accessed),
    )(x2d, w1, b1, w2, b2, w3, b3, w4, b4)

    return out_padded[:, :n_classes]


if __name__ == "__main__":
    # Small, deterministic example consistent with the module's forward.
    parameters = {'input_size': (3, 32, 32), 'n_classes': 10}
    input_size = reduce(lambda a, b: a * b, parameters['input_size'])  # 3072
    hidden_dim = 32
    n_classes = parameters['n_classes']
    batch = 2

    key = jax.random.PRNGKey(0)
    k_x, k_p = jax.random.split(key)

    x = jax.random.normal(k_x, (batch,) + parameters['input_size'],
                          dtype=jnp.float32)  # NCHW, like PyTorch
    params = make_base_model_params(k_p, input_size, hidden_dim, n_classes)

    out = base_model_forward(x, params, input_size, n_classes)
    out = jax.block_until_ready(out)

    # Pure-JAX reference using the same bf16-operand / f32-accumulate math
    # (unpadded weights — zero-padded lanes in the kernel contribute exactly 0).
    def ref_forward(x_nchw, params):
        w1, b1, w2, b2, w3, b3, w4, b4 = params
        h = x_nchw.reshape(-1, input_size).astype(jnp.bfloat16)
        h = jnp.maximum(jnp.dot(h, w1, preferred_element_type=jnp.float32) + b1, 0.0)
        h = jnp.maximum(jnp.dot(h.astype(jnp.bfloat16), w2,
                                preferred_element_type=jnp.float32) + b2, 0.0)
        h = jnp.maximum(jnp.dot(h.astype(jnp.bfloat16), w3,
                                preferred_element_type=jnp.float32) + b3, 0.0)
        return jnp.dot(h.astype(jnp.bfloat16), w4,
                       preferred_element_type=jnp.float32) + b4

    ref = jax.block_until_ready(ref_forward(x, params))
    assert out.shape == (batch, n_classes)
    assert jnp.allclose(out, ref, atol=1e-2, rtol=1e-2)

    print("KERNEL_OK")
</pallas_src>

<mosaic_0001>
module attributes {stable_mosaic.version = 11 : i64} {
  func.func @mlp_kernel(%arg0: i32, %arg1: memref<2x3072xf32, #tpu.memory_space<vmem>>, %arg2: memref<3072x128xbf16, #tpu.memory_space<vmem>>, %arg3: memref<1x128xf32, #tpu.memory_space<vmem>>, %arg4: memref<128x128xbf16, #tpu.memory_space<vmem>>, %arg5: memref<1x128xf32, #tpu.memory_space<vmem>>, %arg6: memref<128x128xbf16, #tpu.memory_space<vmem>>, %arg7: memref<1x128xf32, #tpu.memory_space<vmem>>, %arg8: memref<128x128xbf16, #tpu.memory_space<vmem>>, %arg9: memref<1x128xf32, #tpu.memory_space<vmem>>, %arg10: memref<2x128xf32, #tpu.memory_space<vmem>>) attributes {dimension_semantics = [#tpu.dimension_semantics<parallel>], iteration_bounds = array<i64: 1>, scalar_prefetch = 0 : i64, scratch_operands = 0 : i64, tpu.core_type = #tpu.core_type<tc>, window_params = [{transform_indices = @transform_0, window_bounds = array<i64: 2, 3072>}, {pipeline_mode = #tpu.pipeline_mode<synchronous>, transform_indices = @transform_1, window_bounds = array<i64: 3072, 128>}, {pipeline_mode = #tpu.pipeline_mode<synchronous>, transform_indices = @transform_2, window_bounds = array<i64: 1, 128>}, {pipeline_mode = #tpu.pipeline_mode<synchronous>, transform_indices = @transform_3, window_bounds = array<i64: 128, 128>}, {pipeline_mode = #tpu.pipeline_mode<synchronous>, transform_indices = @transform_4, window_bounds = array<i64: 1, 128>}, {pipeline_mode = #tpu.pipeline_mode<synchronous>, transform_indices = @transform_5, window_bounds = array<i64: 128, 128>}, {pipeline_mode = #tpu.pipeline_mode<synchronous>, transform_indices = @transform_6, window_bounds = array<i64: 1, 128>}, {pipeline_mode = #tpu.pipeline_mode<synchronous>, transform_indices = @transform_7, window_bounds = array<i64: 128, 128>}, {pipeline_mode = #tpu.pipeline_mode<synchronous>, transform_indices = @transform_8, window_bounds = array<i64: 1, 128>}, {transform_indices = @transform_9, window_bounds = array<i64: 2, 128>}]} {
    %c0 = arith.constant 0 : index
    %c0_0 = arith.constant 0 : index
    %0 = vector.load %arg1[%c0, %c0_0] : memref<2x3072xf32, #tpu.memory_space<vmem>>, vector<2x3072xf32>
    %1 = arith.truncf %0 : vector<2x3072xf32> to vector<2x3072xbf16>
    %c0_1 = arith.constant 0 : index
    %c0_2 = arith.constant 0 : index
    %2 = vector.load %arg2[%c0_1, %c0_2] : memref<3072x128xbf16, #tpu.memory_space<vmem>>, vector<3072x128xbf16>
    %cst = arith.constant dense<0.000000e+00> : vector<2x128xf32>
    %3 = tpu.matmul %1, %2, %cst {dimension_numbers = #tpu.dot_dimension_numbers<[1], [0], [0], [1], [0, 0, 1, 1], [], []>} : vector<2x3072xbf16>, vector<3072x128xbf16>, vector<2x128xf32> -> vector<2x128xf32>
    %c0_3 = arith.constant 0 : index
    %c0_4 = arith.constant 0 : index
    %4 = vector.load %arg3[%c0_3, %c0_4] : memref<1x128xf32, #tpu.memory_space<vmem>>, vector<1x128xf32>
    %5 = vector.broadcast %4 : vector<1x128xf32> to vector<2x128xf32>
    %6 = arith.addf %3, %5 : vector<2x128xf32>
    %cst_5 = arith.constant 0.000000e+00 : f32
    %7 = vector.broadcast %cst_5 : f32 to vector<2x128xf32>
    %8 = arith.maximumf %6, %7 : vector<2x128xf32>
    %9 = arith.truncf %8 : vector<2x128xf32> to vector<2x128xbf16>
    %c0_6 = arith.constant 0 : index
    %c0_7 = arith.constant 0 : index
    %10 = vector.load %arg4[%c0_6, %c0_7] : memref<128x128xbf16, #tpu.memory_space<vmem>>, vector<128x128xbf16>
    %cst_8 = arith.constant dense<0.000000e+00> : vector<2x128xf32>
    %11 = tpu.matmul %9, %10, %cst_8 {dimension_numbers = #tpu.dot_dimension_numbers<[1], [0], [0], [1], [0, 0, 1, 1], [], []>} : vector<2x128xbf16>, vector<128x128xbf16>, vector<2x128xf32> -> vector<2x128xf32>
    %c0_9 = arith.constant 0 : index
    %c0_10 = arith.constant 0 : index
    %12 = vector.load %arg5[%c0_9, %c0_10] : memref<1x128xf32, #tpu.memory_space<vmem>>, vector<1x128xf32>
    %13 = vector.broadcast %12 : vector<1x128xf32> to vector<2x128xf32>
    %14 = arith.addf %11, %13 : vector<2x128xf32>
    %cst_11 = arith.constant 0.000000e+00 : f32
    %15 = vector.broadcast %cst_11 : f32 to vector<2x128xf32>
    %16 = arith.maximumf %14, %15 : vector<2x128xf32>
    %17 = arith.truncf %16 : vector<2x128xf32> to vector<2x128xbf16>
    %c0_12 = arith.constant 0 : index
    %c0_13 = arith.constant 0 : index
    %18 = vector.load %arg6[%c0_12, %c0_13] : memref<128x128xbf16, #tpu.memory_space<vmem>>, vector<128x128xbf16>
    %cst_14 = arith.constant dense<0.000000e+00> : vector<2x128xf32>
    %19 = tpu.matmul %17, %18, %cst_14 {dimension_numbers = #tpu.dot_dimension_numbers<[1], [0], [0], [1], [0, 0, 1, 1], [], []>} : vector<2x128xbf16>, vector<128x128xbf16>, vector<2x128xf32> -> vector<2x128xf32>
    %c0_15 = arith.constant 0 : index
    %c0_16 = arith.constant 0 : index
    %20 = vector.load %arg7[%c0_15, %c0_16] : memref<1x128xf32, #tpu.memory_space<vmem>>, vector<1x128xf32>
    %21 = vector.broadcast %20 : vector<1x128xf32> to vector<2x128xf32>
    %22 = arith.addf %19, %21 : vector<2x128xf32>
    %cst_17 = arith.constant 0.000000e+00 : f32
    %23 = vector.broadcast %cst_17 : f32 to vector<2x128xf32>
    %24 = arith.maximumf %22, %23 : vector<2x128xf32>
    %25 = arith.truncf %24 : vector<2x128xf32> to vector<2x128xbf16>
    %c0_18 = arith.constant 0 : index
    %c0_19 = arith.constant 0 : index
    %26 = vector.load %arg8[%c0_18, %c0_19] : memref<128x128xbf16, #tpu.memory_space<vmem>>, vector<128x128xbf16>
    %cst_20 = arith.constant dense<0.000000e+00> : vector<2x128xf32>
    %27 = tpu.matmul %25, %26, %cst_20 {dimension_numbers = #tpu.dot_dimension_numbers<[1], [0], [0], [1], [0, 0, 1, 1], [], []>} : vector<2x128xbf16>, vector<128x128xbf16>, vector<2x128xf32> -> vector<2x128xf32>
    %c0_21 = arith.constant 0 : index
    %c0_22 = arith.constant 0 : index
    %28 = vector.load %arg9[%c0_21, %c0_22] : memref<1x128xf32, #tpu.memory_space<vmem>>, vector<1x128xf32>
    %29 = vector.broadcast %28 : vector<1x128xf32> to vector<2x128xf32>
    %30 = arith.addf %27, %29 : vector<2x128xf32>
    %c0_23 = arith.constant 0 : index
    %c0_24 = arith.constant 0 : index
    %31 = vector.load %arg10[%c0_23, %c0_24] : memref<2x128xf32, #tpu.memory_space<vmem>>, vector<2x128xf32>
    tpu.vector_store %arg10[%c0_23, %c0_24], %30 {strides = array<i32>} : memref<2x128xf32, #tpu.memory_space<vmem>>, vector<2x128xf32>,
    return
  }
  func.func @transform_0(%arg0: i32) -> (i32, i32) {
    %c0_i32 = arith.constant 0 : i32
    %c0_i32_0 = arith.constant 0 : i32
    return %arg0, %c0_i32 : i32, i32
  }
  func.func @transform_1(%arg0: i32) -> (i32, i32) {
    %c0_i32 = arith.constant 0 : i32
    %c0_i32_0 = arith.constant 0 : i32
    %c0_i32_1 = arith.constant 0 : i32
    return %c0_i32, %c0_i32_0 : i32, i32
  }
  func.func @transform_2(%arg0: i32) -> (i32, i32) {
    %c0_i32 = arith.constant 0 : i32
    %c0_i32_0 = arith.constant 0 : i32
    %c0_i32_1 = arith.constant 0 : i32
    return %c0_i32, %c0_i32_0 : i32, i32
  }
  func.func @transform_3(%arg0: i32) -> (i32, i32) {
    %c0_i32 = arith.constant 0 : i32
    %c0_i32_0 = arith.constant 0 : i32
    %c0_i32_1 = arith.constant 0 : i32
    return %c0_i32, %c0_i32_0 : i32, i32
  }
  func.func @transform_4(%arg0: i32) -> (i32, i32) {
    %c0_i32 = arith.constant 0 : i32
    %c0_i32_0 = arith.constant 0 : i32
    %c0_i32_1 = arith.constant 0 : i32
    return %c0_i32, %c0_i32_0 : i32, i32
  }
  func.func @transform_5(%arg0: i32) -> (i32, i32) {
    %c0_i32 = arith.constant 0 : i32
    %c0_i32_0 = arith.constant 0 : i32
    %c0_i32_1 = arith.constant 0 : i32
    return %c0_i32, %c0_i32_0 : i32, i32
  }
  func.func @transform_6(%arg0: i32) -> (i32, i32) {
    %c0_i32 = arith.constant 0 : i32
    %c0_i32_0 = arith.constant 0 : i32
    %c0_i32_1 = arith.constant 0 : i32
    return %c0_i32, %c0_i32_0 : i32, i32
  }
  func.func @transform_7(%arg0: i32) -> (i32, i32) {
    %c0_i32 = arith.constant 0 : i32
    %c0_i32_0 = arith.constant 0 : i32
    %c0_i32_1 = arith.constant 0 : i32
    return %c0_i32, %c0_i32_0 : i32, i32
  }
  func.func @transform_8(%arg0: i32) -> (i32, i32) {
    %c0_i32 = arith.constant 0 : i32
    %c0_i32_0 = arith.constant 0 : i32
    %c0_i32_1 = arith.constant 0 : i32
    return %c0_i32, %c0_i32_0 : i32, i32
  }
  func.func @transform_9(%arg0: i32) -> (i32, i32) {
    %c0_i32 = arith.constant 0 : i32
    %c0_i32_0 = arith.constant 0 : i32
    return %arg0, %c0_i32 : i32, i32
  }
}

</mosaic_0001>

<llo_original>
// kernel: tpu_custom_call.1
$region0: #{tpu_custom_call.1}
  #allocation0 [shape = 'u32[]', space=smem, size = 0x4, offset = 0x4, fixed_abs, tag = 'smem constant byte address 0x4 - core index']
  #allocation1 [shape = 'u32[144,128]{1,0:T(1,128)}', space=vmem, size = 0x12000, scoped, tag = 'internal scratch']
  %s0 = inlined_call_operand.hbm [shape: f32[2,3072], index: 0, kind: input, shape index: {}]
  %s1 = inlined_call_operand.hbm [shape: bf16[3072,128], index: 1, kind: input, shape index: {}]
  %s2 = inlined_call_operand.vmem [shape: f32[1,128], index: 2, kind: input, shape index: {}]
  %s3 = inlined_call_operand.hbm [shape: bf16[128,128], index: 3, kind: input, shape index: {}]
  %s4 = inlined_call_operand.vmem [shape: f32[1,128], index: 4, kind: input, shape index: {}]
  %s5 = inlined_call_operand.hbm [shape: bf16[128,128], index: 5, kind: input, shape index: {}]
  %s6 = inlined_call_operand.vmem [shape: f32[1,128], index: 6, kind: input, shape index: {}]
  %s7 = inlined_call_operand.hbm [shape: bf16[128,128], index: 7, kind: input, shape index: {}]
  %s8 = inlined_call_operand.vmem [shape: f32[1,128], index: 8, kind: input, shape index: {}]
  %s9 = inlined_call_operand.hbm [shape: f32[2,128], index: 9, kind: output, shape index: {}]
  %s10 = sld [smem:[#allocation0]]
  $region66: #{tpu_custom_call.1} parent=0
    _
  %s12 = ssub.s32 1, %s10
  %s13 = scalar_select 0, %s12, %s10
  $region1: #{tpu_custom_call.1} parent=0
    #allocation2 [shape = 'u8[24576]{0}', space=vmem, size = 0x6000, scoped, tag = 'input window, operand 0, single buffered']
    #allocation3 [shape = 's32[1]{0}', space=sflag, size = 0x4, scoped, tag = 'scoped memory for tpu_custom_call.1']
    #allocation4 [shape = 's32[1]{0}', space=sflag, size = 0x4, scoped, tag = 'scoped memory for tpu_custom_call.1']
    #allocation5 [shape = 'u8[786432]{0}', space=vmem, size = 0xc0000, scoped, tag = 'input window, operand 1, single buffered']
    #allocation6 [shape = 's32[1]{0}', space=sflag, size = 0x4, scoped, tag = 'scoped memory for tpu_custom_call.1']
    #allocation7 [shape = 'u8[32768]{0}', space=vmem, size = 0x8000, scoped, tag = 'input window, operand 3, single buffered']
    #allocation8 [shape = 'u8[32768]{0}', space=vmem, size = 0x8000, scoped, tag = 'input window, operand 5, single buffered']
    #allocation9 [shape = 's32[1]{0}', space=sflag, size = 0x4, scoped, tag = 'scoped memory for tpu_custom_call.1']
    #allocation10 [shape = 'u8[32768]{0}', space=vmem, size = 0x8000, scoped, tag = 'input window, operand 7, single buffered']
    #allocation11 [shape = 'u8[1024]{0}', space=vmem, size = 0x400, scoped, tag = 'output window, operand 0, single buffered']
    %14 = vsyncpa [#allocation3], 0
    %15 = vsyncpa [#allocation6], 0
    %16 = vsyncpa [#allocation9], 0
    %17 = vsyncpa [#allocation4], 0
    // Predicated region
    $region2: #{tpu_custom_call.1} parent=1 // pred_check
      _
    $region3: #{tpu_custom_call.1} parent=1 // pred_check_branch
      %19 = sbr.rel (0) target = $region5
    $region4: #{tpu_custom_call.1} parent=1 // pred_region
      %s21 = ssub.s32 768, 768
      %22 = vsyncadd [#allocation3], %s21
      %s24 = sshll.u32 [#allocation2], 4
      %s25 = int_to_ptr.vmem [resolvable:$true] %s24
      %27 = dma.hbm_to_vmem [thread:$0]  %s0, 768, %s25, [#allocation3]
    $region5: #{tpu_custom_call.1} parent=1 // pred_fallthru
      _
    // Predicated region
    $region6: #{tpu_custom_call.1} parent=1 // pred_check
      _
    $region7: #{tpu_custom_call.1} parent=1 // pred_check_branch
      %29 = sbr.rel (0) target = $region9
    $region8: #{tpu_custom_call.1} parent=1 // pred_region
      %s31 = ssub.s32 24576, 24576
      %32 = vsyncadd [#allocation6], %s31
      %s33 = sshll.u32 [#allocation5], 4
      %s34 = int_to_ptr.vmem [resolvable:$true] %s33
      %39 = dma.hbm_to_vmem [thread:$0]  %s1, 24576, %s34, [#allocation6], 64, 64, 4
    $region9: #{tpu_custom_call.1} parent=1 // pred_fallthru
      _
    // Predicated region
    $region10: #{tpu_custom_call.1} parent=1 // pred_check
      _
    $region11: #{tpu_custom_call.1} parent=1 // pred_check_branch
      %41 = sbr.rel (0) target = $region13
    $region12: #{tpu_custom_call.1} parent=1 // pred_region
      _
    $region13: #{tpu_custom_call.1} parent=1 // pred_fallthru
      _
    // Predicated region
    $region14: #{tpu_custom_call.1} parent=1 // pred_check
      _
    $region15: #{tpu_custom_call.1} parent=1 // pred_check_branch
      %43 = sbr.rel (0) target = $region17
    $region16: #{tpu_custom_call.1} parent=1 // pred_region
      %s45 = ssub.s32 1024, 1024
      %46 = vsyncadd [#allocation6], %s45
      %s47 = sshll.u32 [#allocation7], 4
      %s48 = int_to_ptr.vmem [resolvable:$true] %s47
      %53 = dma.hbm_to_vmem [thread:$0]  %s3, 1024, %s48, [#allocation6], 64, 64, 4
    $region17: #{tpu_custom_call.1} parent=1 // pred_fallthru
      _
    // Predicated region
    $region18: #{tpu_custom_call.1} parent=1 // pred_check
      _
    $region19: #{tpu_custom_call.1} parent=1 // pred_check_branch
      %55 = sbr.rel (0) target = $region21
    $region20: #{tpu_custom_call.1} parent=1 // pred_region
      _
    $region21: #{tpu_custom_call.1} parent=1 // pred_fallthru
      _
    // Predicated region
    $region22: #{tpu_custom_call.1} parent=1 // pred_check
      _
    $region23: #{tpu_custom_call.1} parent=1 // pred_check_branch
      %57 = sbr.rel (0) target = $region25
    $region24: #{tpu_custom_call.1} parent=1 // pred_region
      %s59 = ssub.s32 1024, 1024
      %60 = vsyncadd [#allocation9], %s59
      %s61 = sshll.u32 [#allocation8], 4
      %s62 = int_to_ptr.vmem [resolvable:$true] %s61
      %67 = dma.hbm_to_vmem [thread:$0]  %s5, 1024, %s62, [#allocation9], 64, 64, 4
    $region25: #{tpu_custom_call.1} parent=1 // pred_fallthru
      _
    // Predicated region
    $region26: #{tpu_custom_call.1} parent=1 // pred_check
      _
    $region27: #{tpu_custom_call.1} parent=1 // pred_check_branch
      %69 = sbr.rel (0) target = $region29
    $region28: #{tpu_custom_call.1} parent=1 // pred_region
      _
    $region29: #{tpu_custom_call.1} parent=1 // pred_fallthru
      _
    // Predicated region
    $region30: #{tpu_custom_call.1} parent=1 // pred_check
      _
    $region31: #{tpu_custom_call.1} parent=1 // pred_check_branch
      %71 = sbr.rel (0) target = $region33
    $region32: #{tpu_custom_call.1} parent=1 // pred_region
      %s73 = ssub.s32 1024, 1024
      %74 = vsyncadd [#allocation9], %s73
      %s75 = sshll.u32 [#allocation10], 4
      %s76 = int_to_ptr.vmem [resolvable:$true] %s75
      %81 = dma.hbm_to_vmem [thread:$0]  %s7, 1024, %s76, [#allocation9], 64, 64, 4
    $region33: #{tpu_custom_call.1} parent=1 // pred_fallthru
      _
    // Predicated region
    $region34: #{tpu_custom_call.1} parent=1 // pred_check
      _
    $region35: #{tpu_custom_call.1} parent=1 // pred_check_branch
      %83 = sbr.rel (0) target = $region37
    $region36: #{tpu_custom_call.1} parent=1 // pred_region
      _
    $region37: #{tpu_custom_call.1} parent=1 // pred_fallthru
      _
    // Predicated region
    $region38: #{tpu_custom_call.1} parent=1 // pred_check
      _
    $region39: #{tpu_custom_call.1} parent=1 // pred_check_branch
      %85 = sbr.rel (0) target = $region41
    $region40: #{tpu_custom_call.1} parent=1 // pred_region
      %86 = dma.done [#allocation3], 768
    $region41: #{tpu_custom_call.1} parent=1 // pred_fallthru
      _
    // Predicated region
    $region42: #{tpu_custom_call.1} parent=1 // pred_check
      _
    $region43: #{tpu_custom_call.1} parent=1 // pred_check_branch
      %88 = sbr.rel (0) target = $region45
    $region44: #{tpu_custom_call.1} parent=1 // pred_region
      %89 = dma.done [#allocation6], 24576
    $region45: #{tpu_custom_call.1} parent=1 // pred_fallthru
      _
    // Predicated region
    $region46: #{tpu_custom_call.1} parent=1 // pred_check
      _
    $region47: #{tpu_custom_call.1} parent=1 // pred_check_branch
      %91 = sbr.rel (0) target = $region49
    $region48: #{tpu_custom_call.1} parent=1 // pred_region
      %92 = dma.done [#allocation6], 1024
    $region49: #{tpu_custom_call.1} parent=1 // pred_fallthru
      _
    // Predicated region
    $region50: #{tpu_custom_call.1} parent=1 // pred_check
      _
    $region51: #{tpu_custom_call.1} parent=1 // pred_check_branch
      %94 = sbr.rel (0) target = $region53
    $region52: #{tpu_custom_call.1} parent=1 // pred_region
      %95 = dma.done [#allocation9], 1024
    $region53: #{tpu_custom_call.1} parent=1 // pred_fallthru
      _
    // Predicated region
    $region54: #{tpu_custom_call.1} parent=1 // pred_check
      _
    $region55: #{tpu_custom_call.1} parent=1 // pred_check_branch
      %97 = sbr.rel (0) target = $region57
    $region56: #{tpu_custom_call.1} parent=1 // pred_region
      %98 = dma.done [#allocation9], 1024
    $region57: #{tpu_custom_call.1} parent=1 // pred_fallthru
      _
    %v100 = vld [vmem:[#allocation2] sm:$0xff]
    %v101 = vld [vmem:[#allocation2 + $0x8] sm:$0xff]
    %v102 = vld [vmem:[#allocation2 + $0x10] sm:$0xff]
    %v103 = vld [vmem:[#allocation2 + $0x18] sm:$0xff]
    %v104 = vld [vmem:[#allocation2 + $0x20] sm:$0xff]
    %v105 = vld [vmem:[#allocation2 + $0x28] sm:$0xff]
    %v112 = vcombine.high %v100, %v100
    %v114 = vunpack.c.l.s4 1983009808
    %v115 = vunpack.c.0.s8 %v114
    %v116 = vlaneseq
    %v117 = vshrl.u32 %v116, 7
    %v118 = vsub.s32 %v115, %v117
    %v119 = vrot.slane %v100, %v118
    %v121 = vunpack.c.l.s4 1983009808
    %v122 = vunpack.c.0.s8 %v121
    %v123 = vlaneseq
    %v124 = vshrl.u32 %v123, 7
    %v125 = vsub.s32 %v122, %v124
    %v126 = vrot.slane %v112, %v125
    %v127 = vcombine.high %v119, %v119
    %v128 = vcombine.high %v126, %v126
    %v129 = vcombine.high %v101, %v101
    %v131 = vunpack.c.l.s4 1983009808
    %v132 = vunpack.c.0.s8 %v131
    %v133 = vlaneseq
    %v134 = vshrl.u32 %v133, 7
    %v135 = vsub.s32 %v132, %v134
    %v136 = vrot.slane %v101, %v135
    %v138 = vunpack.c.l.s4 1983009808
    %v139 = vunpack.c.0.s8 %v138
    %v140 = vlaneseq
    %v141 = vshrl.u32 %v140, 7
    %v142 = vsub.s32 %v139, %v141
    %v143 = vrot.slane %v129, %v142
    %v144 = vcombine.high %v136, %v136
    %v145 = vcombine.high %v143, %v143
    %v146 = vcombine.high %v102, %v102
    %v148 = vunpack.c.l.s4 1983009808
    %v149 = vunpack.c.0.s8 %v148
    %v150 = vlaneseq
    %v151 = vshrl.u32 %v150, 7
    %v152 = vsub.s32 %v149, %v151
    %v153 = vrot.slane %v102, %v152
    %v155 = vunpack.c.l.s4 1983009808
    %v156 = vunpack.c.0.s8 %v155
    %v157 = vlaneseq
    %v158 = vshrl.u32 %v157, 7
    %v159 = vsub.s32 %v156, %v158
    %v160 = vrot.slane %v146, %v159
    %v161 = vcombine.high %v153, %v153
    %v162 = vcombine.high %v160, %v160
    %v163 = vcombine.high %v103, %v103
    %v165 = vunpack.c.l.s4 1983009808
    %v166 = vunpack.c.0.s8 %v165
    %v167 = vlaneseq
    %v168 = vshrl.u32 %v167, 7
    %v169 = vsub.s32 %v166, %v168
    %v170 = vrot.slane %v103, %v169
    %v172 = vunpack.c.l.s4 1983009808
    %v173 = vunpack.c.0.s8 %v172
    %v174 = vlaneseq
    %v175 = vshrl.u32 %v174, 7
    %v176 = vsub.s32 %v173, %v175
    %v177 = vrot.slane %v163, %v176
    %v178 = vcombine.high %v170, %v170
    %v179 = vcombine.high %v177, %v177
    %v180 = vcombine.high %v104, %v104
    %v182 = vunpack.c.l.s4 1983009808
    %v183 = vunpack.c.0.s8 %v182
    %v184 = vlaneseq
    %v185 = vshrl.u32 %v184, 7
    %v186 = vsub.s32 %v183, %v185
    %v187 = vrot.slane %v104, %v186
    %v189 = vunpack.c.l.s4 1983009808
    %v190 = vunpack.c.0.s8 %v189
    %v191 = vlaneseq
    %v192 = vshrl.u32 %v191, 7
    %v193 = vsub.s32 %v190, %v192
    %v194 = vrot.slane %v180, %v193
    %v195 = vcombine.high %v187, %v187
    %v196 = vcombine.high %v194, %v194
    %v197 = vcombine.high %v105, %v105
    %v199 = vunpack.c.l.s4 1983009808
    %v200 = vunpack.c.0.s8 %v199
    %v201 = vlaneseq
    %v202 = vshrl.u32 %v201, 7
    %v203 = vsub.s32 %v200, %v202
    %v204 = vrot.slane %v105, %v203
    %v206 = vunpack.c.l.s4 1983009808
    %v207 = vunpack.c.0.s8 %v206
    %v208 = vlaneseq
    %v209 = vshrl.u32 %v208, 7
    %v210 = vsub.s32 %v207, %v209
    %v211 = vrot.slane %v197, %v210
    %v212 = vcombine.high %v204, %v204
    %v213 = vcombine.high %v211, %v211
    %v238 = vpack.c.bf16 %v119, %v119
    %v239 = vpack.c.bf16 %v127, %v127
    %v240 = vpack.c.bf16 %v126, %v126
    %v241 = vpack.c.bf16 %v128, %v128
    %v242 = vpack.c.bf16 %v136, %v136
    %v243 = vpack.c.bf16 %v144, %v144
    %v244 = vpack.c.bf16 %v143, %v143
    %v245 = vpack.c.bf16 %v145, %v145
    %v246 = vpack.c.bf16 %v153, %v153
    %v247 = vpack.c.bf16 %v161, %v161
    %v248 = vpack.c.bf16 %v160, %v160
    %v249 = vpack.c.bf16 %v162, %v162
    %v250 = vpack.c.bf16 %v170, %v170
    %v251 = vpack.c.bf16 %v178, %v178
    %v252 = vpack.c.bf16 %v177, %v177
    %v253 = vpack.c.bf16 %v179, %v179
    %v254 = vpack.c.bf16 %v187, %v187
    %v255 = vpack.c.bf16 %v195, %v195
    %v256 = vpack.c.bf16 %v194, %v194
    %v257 = vpack.c.bf16 %v196, %v196
    %v258 = vpack.c.bf16 %v204, %v204
    %v259 = vpack.c.bf16 %v212, %v212
    %v260 = vpack.c.bf16 %v211, %v211
    %v261 = vpack.c.bf16 %v213, %v213
    %v262 = vld [vmem:[#allocation5] sm:$0xf]
    %v263 = vld [vmem:[#allocation5 + $0x4] sm:$0xf]
    %v264 = vld [vmem:[#allocation5 + $0x8] sm:$0xf]
    %v265 = vld [vmem:[#allocation5 + $0xc] sm:$0xf]
    %v266 = vld [vmem:[#allocation5 + $0x10] sm:$0xf]
    %v267 = vld [vmem:[#allocation5 + $0x14] sm:$0xf]
    %v268 = vld [vmem:[#allocation5 + $0x18] sm:$0xf]
    %v269 = vld [vmem:[#allocation5 + $0x1c] sm:$0xf]
    %v270 = vld [vmem:[#allocation5 + $0x20] sm:$0xf]
    %v271 = vld [vmem:[#allocation5 + $0x24] sm:$0xf]
    %v272 = vld [vmem:[#allocation5 + $0x28] sm:$0xf]
    %v273 = vld [vmem:[#allocation5 + $0x2c] sm:$0xf]
    %v274 = vld [vmem:[#allocation5 + $0x30] sm:$0xf]
    %v275 = vld [vmem:[#allocation5 + $0x34] sm:$0xf]
    %v276 = vld [vmem:[#allocation5 + $0x38] sm:$0xf]
    %v277 = vld [vmem:[#allocation5 + $0x3c] sm:$0xf]
    %v278 = vld [vmem:[#allocation5 + $0x40] sm:$0xf]
    %v279 = vld [vmem:[#allocation5 + $0x44] sm:$0xf]
    %v280 = vld [vmem:[#allocation5 + $0x48] sm:$0xf]
    %v281 = vld [vmem:[#allocation5 + $0x4c] sm:$0xf]
    %v282 = vld [vmem:[#allocation5 + $0x50] sm:$0xf]
    %v283 = vld [vmem:[#allocation5 + $0x54] sm:$0xf]
    %v284 = vld [vmem:[#allocation5 + $0x58] sm:$0xf]
    %v285 = vld [vmem:[#allocation5 + $0x5c] sm:$0xf]
    %v286 = vld [vmem:[#allocation5 + $0x60] sm:$0xf]
    %v287 = vld [vmem:[#allocation5 + $0x64] sm:$0xf]
    %v288 = vld [vmem:[#allocation5 + $0x68] sm:$0xf]
    %v289 = vld [vmem:[#allocation5 + $0x6c] sm:$0xf]
    %v290 = vld [vmem:[#allocation5 + $0x70] sm:$0xf]
    %v291 = vld [vmem:[#allocation5 + $0x74] sm:$0xf]
    %v292 = vld [vmem:[#allocation5 + $0x78] sm:$0xf]
    %v293 = vld [vmem:[#allocation5 + $0x7c] sm:$0xf]
    %v294 = vld [vmem:[#allocation5 + $0x80] sm:$0xf]
    %v295 = vld [vmem:[#allocation5 + $0x84] sm:$0xf]
    %v296 = vld [vmem:[#allocation5 + $0x88] sm:$0xf]
    %v297 = vld [vmem:[#allocation5 + $0x8c] sm:$0xf]
    %v298 = vld [vmem:[#allocation5 + $0x90] sm:$0xf]
    %v299 = vld [vmem:[#allocation5 + $0x94] sm:$0xf]
    %v300 = vld [vmem:[#allocation5 + $0x98] sm:$0xf]
    %v301 = vld [vmem:[#allocation5 + $0x9c] sm:$0xf]
    %v302 = vld [vmem:[#allocation5 + $0xa0] sm:$0xf]
    %v303 = vld [vmem:[#allocation5 + $0xa4] sm:$0xf]
    %v304 = vld [vmem:[#allocation5 + $0xa8] sm:$0xf]
    %v305 = vld [vmem:[#allocation5 + $0xac] sm:$0xf]
    %v306 = vld [vmem:[#allocation5 + $0xb0] sm:$0xf]
    %v307 = vld [vmem:[#allocation5 + $0xb4] sm:$0xf]
    %v308 = vld [vmem:[#allocation5 + $0xb8] sm:$0xf]
    %v309 = vld [vmem:[#allocation5 + $0xbc] sm:$0xf]
    %v310 = vld [vmem:[#allocation5 + $0xc0] sm:$0xf]
    %v311 = vld [vmem:[#allocation5 + $0xc4] sm:$0xf]
    %v312 = vld [vmem:[#allocation5 + $0xc8] sm:$0xf]
    %v313 = vld [vmem:[#allocation5 + $0xcc] sm:$0xf]
    %v314 = vld [vmem:[#allocation5 + $0xd0] sm:$0xf]
    %v315 = vld [vmem:[#allocation5 + $0xd4] sm:$0xf]
    %v316 = vld [vmem:[#allocation5 + $0xd8] sm:$0xf]
    %v317 = vld [vmem:[#allocation5 + $0xdc] sm:$0xf]
    %v318 = vld [vmem:[#allocation5 + $0xe0] sm:$0xf]
    %v319 = vld [vmem:[#allocation5 + $0xe4] sm:$0xf]
    %v320 = vld [vmem:[#allocation5 + $0xe8] sm:$0xf]
    %v321 = vld [vmem:[#allocation5 + $0xec] sm:$0xf]
    %v322 = vld [vmem:[#allocation5 + $0xf0] sm:$0xf]
    %v323 = vld [vmem:[#allocation5 + $0xf4] sm:$0xf]
    %v324 = vld [vmem:[#allocation5 + $0xf8] sm:$0xf]
    %v325 = vld [vmem:[#allocation5 + $0xfc] sm:$0xf]
    %v326 = vld [vmem:[#allocation5 + $0x100] sm:$0xf]
    %v327 = vld [vmem:[#allocation5 + $0x104] sm:$0xf]
    %v328 = vld [vmem:[#allocation5 + $0x108] sm:$0xf]
    %v329 = vld [vmem:[#allocation5 + $0x10c] sm:$0xf]
    %v330 = vld [vmem:[#allocation5 + $0x110] sm:$0xf]
    %v331 = vld [vmem:[#allocation5 + $0x114] sm:$0xf]
    %v332 = vld [vmem:[#allocation5 + $0x118] sm:$0xf]
    %v333 = vld [vmem:[#allocation5 + $0x11c] sm:$0xf]
    %v334 = vld [vmem:[#allocation5 + $0x120] sm:$0xf]
    %v335 = vld [vmem:[#allocation5 + $0x124] sm:$0xf]
    %v336 = vld [vmem:[#allocation5 + $0x128] sm:$0xf]
    %v337 = vld [vmem:[#allocation5 + $0x12c] sm:$0xf]
    %v338 = vld [vmem:[#allocation5 + $0x130] sm:$0xf]
    %v339 = vld [vmem:[#allocation5 + $0x134] sm:$0xf]
    %v340 = vld [vmem:[#allocation5 + $0x138] sm:$0xf]
    %v341 = vld [vmem:[#allocation5 + $0x13c] sm:$0xf]
    %v342 = vld [vmem:[#allocation5 + $0x140] sm:$0xf]
    %v343 = vld [vmem:[#allocation5 + $0x144] sm:$0xf]
    %v344 = vld [vmem:[#allocation5 + $0x148] sm:$0xf]
    %v345 = vld [vmem:[#allocation5 + $0x14c] sm:$0xf]
    %v346 = vld [vmem:[#allocation5 + $0x150] sm:$0xf]
    %v347 = vld [vmem:[#allocation5 + $0x154] sm:$0xf]
    %v348 = vld [vmem:[#allocation5 + $0x158] sm:$0xf]
    %v349 = vld [vmem:[#allocation5 + $0x15c] sm:$0xf]
    %v350 = vld [vmem:[#allocation5 + $0x160] sm:$0xf]
    %v351 = vld [vmem:[#allocation5 + $0x164] sm:$0xf]
    %v352 = vld [vmem:[#allocation5 + $0x168] sm:$0xf]
    %v353 = vld [vmem:[#allocation5 + $0x16c] sm:$0xf]
    %v354 = vld [vmem:[#allocation5 + $0x170] sm:$0xf]
    %v355 = vld [vmem:[#allocation5 + $0x174] sm:$0xf]
    %v356 = vld [vmem:[#allocation5 + $0x178] sm:$0xf]
    %v357 = vld [vmem:[#allocation5 + $0x17c] sm:$0xf]
    %v358 = vld [vmem:[#allocation5 + $0x180] sm:$0xf]
    %v359 = vld [vmem:[#allocation5 + $0x184] sm:$0xf]
    %v360 = vld [vmem:[#allocation5 + $0x188] sm:$0xf]
    %v361 = vld [vmem:[#allocation5 + $0x18c] sm:$0xf]
    %v362 = vld [vmem:[#allocation5 + $0x190] sm:$0xf]
    %v363 = vld [vmem:[#allocation5 + $0x194] sm:$0xf]
    %v364 = vld [vmem:[#allocation5 + $0x198] sm:$0xf]
    %v365 = vld [vmem:[#allocation5 + $0x19c] sm:$0xf]
    %v366 = vld [vmem:[#allocation5 + $0x1a0] sm:$0xf]
    %v367 = vld [vmem:[#allocation5 + $0x1a4] sm:$0xf]
    %v368 = vld [vmem:[#allocation5 + $0x1a8] sm:$0xf]
    %v369 = vld [vmem:[#allocation5 + $0x1ac] sm:$0xf]
    %v370 = vld [vmem:[#allocation5 + $0x1b0] sm:$0xf]
    %v371 = vld [vmem:[#allocation5 + $0x1b4] sm:$0xf]
    %v372 = vld [vmem:[#allocation5 + $0x1b8] sm:$0xf]
    %v373 = vld [vmem:[#allocation5 + $0x1bc] sm:$0xf]
    %v374 = vld [vmem:[#allocation5 + $0x1c0] sm:$0xf]
    %v375 = vld [vmem:[#allocation5 + $0x1c4] sm:$0xf]
    %v376 = vld [vmem:[#allocation5 + $0x1c8] sm:$0xf]
    %v377 = vld [vmem:[#allocation5 + $0x1cc] sm:$0xf]
    %v378 = vld [vmem:[#allocation5 + $0x1d0] sm:$0xf]
    %v379 = vld [vmem:[#allocation5 + $0x1d4] sm:$0xf]
    %v380 = vld [vmem:[#allocation5 + $0x1d8] sm:$0xf]
    %v381 = vld [vmem:[#allocation5 + $0x1dc] sm:$0xf]
    %v382 = vld [vmem:[#allocation5 + $0x1e0] sm:$0xf]
    %v383 = vld [vmem:[#allocation5 + $0x1e4] sm:$0xf]
    %v384 = vld [vmem:[#allocation5 + $0x1e8] sm:$0xf]
    %v385 = vld [vmem:[#allocation5 + $0x1ec] sm:$0xf]
    %v386 = vld [vmem:[#allocation5 + $0x1f0] sm:$0xf]
    %v387 = vld [vmem:[#allocation5 + $0x1f4] sm:$0xf]
    %v388 = vld [vmem:[#allocation5 + $0x1f8] sm:$0xf]
    %v389 = vld [vmem:[#allocation5 + $0x1fc] sm:$0xf]
    %v390 = vld [vmem:[#allocation5 + $0x200] sm:$0xf]
    %v391 = vld [vmem:[#allocation5 + $0x204] sm:$0xf]
    %v392 = vld [vmem:[#allocation5 + $0x208] sm:$0xf]
    %v393 = vld [vmem:[#allocation5 + $0x20c] sm:$0xf]
    %v394 = vld [vmem:[#allocation5 + $0x210] sm:$0xf]
    %v395 = vld [vmem:[#allocation5 + $0x214] sm:$0xf]
    %v396 = vld [vmem:[#allocation5 + $0x218] sm:$0xf]
    %v397 = vld [vmem:[#allocation5 + $0x21c] sm:$0xf]
    %v398 = vld [vmem:[#allocation5 + $0x220] sm:$0xf]
    %v399 = vld [vmem:[#allocation5 + $0x224] sm:$0xf]
    %v400 = vld [vmem:[#allocation5 + $0x228] sm:$0xf]
    %v401 = vld [vmem:[#allocation5 + $0x22c] sm:$0xf]
    %v402 = vld [vmem:[#allocation5 + $0x230] sm:$0xf]
    %v403 = vld [vmem:[#allocation5 + $0x234] sm:$0xf]
    %v404 = vld [vmem:[#allocation5 + $0x238] sm:$0xf]
    %v405 = vld [vmem:[#allocation5 + $0x23c] sm:$0xf]
    %v406 = vld [vmem:[#allocation5 + $0x240] sm:$0xf]
    %v407 = vld [vmem:[#allocation5 + $0x244] sm:$0xf]
    %v408 = vld [vmem:[#allocation5 + $0x248] sm:$0xf]
    %v409 = vld [vmem:[#allocation5 + $0x24c] sm:$0xf]
    %v410 = vld [vmem:[#allocation5 + $0x250] sm:$0xf]
    %v411 = vld [vmem:[#allocation5 + $0x254] sm:$0xf]
    %v412 = vld [vmem:[#allocation5 + $0x258] sm:$0xf]
    %v413 = vld [vmem:[#allocation5 + $0x25c] sm:$0xf]
    %v414 = vld [vmem:[#allocation5 + $0x260] sm:$0xf]
    %v415 = vld [vmem:[#allocation5 + $0x264] sm:$0xf]
    %v416 = vld [vmem:[#allocation5 + $0x268] sm:$0xf]
    %v417 = vld [vmem:[#allocation5 + $0x26c] sm:$0xf]
    %v418 = vld [vmem:[#allocation5 + $0x270] sm:$0xf]
    %v419 = vld [vmem:[#allocation5 + $0x274] sm:$0xf]
    %v420 = vld [vmem:[#allocation5 + $0x278] sm:$0xf]
    %v421 = vld [vmem:[#allocation5 + $0x27c] sm:$0xf]
    %v422 = vld [vmem:[#allocation5 + $0x280] sm:$0xf]
    %v423 = vld [vmem:[#allocation5 + $0x284] sm:$0xf]
    %v424 = vld [vmem:[#allocation5 + $0x288] sm:$0xf]
    %v425 = vld [vmem:[#allocation5 + $0x28c] sm:$0xf]
    %v426 = vld [vmem:[#allocation5 + $0x290] sm:$0xf]
    %v427 = vld [vmem:[#allocation5 + $0x294] sm:$0xf]
    %v428 = vld [vmem:[#allocation5 + $0x298] sm:$0xf]
    %v429 = vld [vmem:[#allocation5 + $0x29c] sm:$0xf]
    %v430 = vld [vmem:[#allocation5 + $0x2a0] sm:$0xf]
    %v431 = vld [vmem:[#allocation5 + $0x2a4] sm:$0xf]
    %v432 = vld [vmem:[#allocation5 + $0x2a8] sm:$0xf]
    %v433 = vld [vmem:[#allocation5 + $0x2ac] sm:$0xf]
    %v434 = vld [vmem:[#allocation5 + $0x2b0] sm:$0xf]
    %v435 = vld [vmem:[#allocation5 + $0x2b4] sm:$0xf]
    %v436 = vld [vmem:[#allocation5 + $0x2b8] sm:$0xf]
    %v437 = vld [vmem:[#allocation5 + $0x2bc] sm:$0xf]
    %v438 = vld [vmem:[#allocation5 + $0x2c0] sm:$0xf]
    %v439 = vld [vmem:[#allocation5 + $0x2c4] sm:$0xf]
    %v440 = vld [vmem:[#allocation5 + $0x2c8] sm:$0xf]
    %v441 = vld [vmem:[#allocation5 + $0x2cc] sm:$0xf]
    %v442 = vld [vmem:[#allocation5 + $0x2d0] sm:$0xf]
    %v443 = vld [vmem:[#allocation5 + $0x2d4] sm:$0xf]
    %v444 = vld [vmem:[#allocation5 + $0x2d8] sm:$0xf]
    %v445 = vld [vmem:[#allocation5 + $0x2dc] sm:$0xf]
    %v446 = vld [vmem:[#allocation5 + $0x2e0] sm:$0xf]
    %v447 = vld [vmem:[#allocation5 + $0x2e4] sm:$0xf]
    %v448 = vld [vmem:[#allocation5 + $0x2e8] sm:$0xf]
    %v449 = vld [vmem:[#allocation5 + $0x2ec] sm:$0xf]
    %v450 = vld [vmem:[#allocation5 + $0x2f0] sm:$0xf]
    %v451 = vld [vmem:[#allocation5 + $0x2f4] sm:$0xf]
    %v452 = vld [vmem:[#allocation5 + $0x2f8] sm:$0xf]
    %v453 = vld [vmem:[#allocation5 + $0x2fc] sm:$0xf]
    %v454 = vld [vmem:[#allocation5 + $0x300] sm:$0xf]
    %v455 = vld [vmem:[#allocation5 + $0x304] sm:$0xf]
    %v456 = vld [vmem:[#allocation5 + $0x308] sm:$0xf]
    %v457 = vld [vmem:[#allocation5 + $0x30c] sm:$0xf]
    %v458 = vld [vmem:[#allocation5 + $0x310] sm:$0xf]
    %v459 = vld [vmem:[#allocation5 + $0x314] sm:$0xf]
    %v460 = vld [vmem:[#allocation5 + $0x318] sm:$0xf]
    %v461 = vld [vmem:[#allocation5 + $0x31c] sm:$0xf]
    %v462 = vld [vmem:[#allocation5 + $0x320] sm:$0xf]
    %v463 = vld [vmem:[#allocation5 + $0x324] sm:$0xf]
    %v464 = vld [vmem:[#allocation5 + $0x328] sm:$0xf]
    %v465 = vld [vmem:[#allocation5 + $0x32c] sm:$0xf]
    %v466 = vld [vmem:[#allocation5 + $0x330] sm:$0xf]
    %v467 = vld [vmem:[#allocation5 + $0x334] sm:$0xf]
    %v468 = vld [vmem:[#allocation5 + $0x338] sm:$0xf]
    %v469 = vld [vmem:[#allocation5 + $0x33c] sm:$0xf]
    %v470 = vld [vmem:[#allocation5 + $0x340] sm:$0xf]
    %v471 = vld [vmem:[#allocation5 + $0x344] sm:$0xf]
    %v472 = vld [vmem:[#allocation5 + $0x348] sm:$0xf]
    %v473 = vld [vmem:[#allocation5 + $0x34c] sm:$0xf]
    %v474 = vld [vmem:[#allocation5 + $0x350] sm:$0xf]
    %v475 = vld [vmem:[#allocation5 + $0x354] sm:$0xf]
    %v476 = vld [vmem:[#allocation5 + $0x358] sm:$0xf]
    %v477 = vld [vmem:[#allocation5 + $0x35c] sm:$0xf]
    %v478 = vld [vmem:[#allocation5 + $0x360] sm:$0xf]
    %v479 = vld [vmem:[#allocation5 + $0x364] sm:$0xf]
    %v480 = vld [vmem:[#allocation5 + $0x368] sm:$0xf]
    %v481 = vld [vmem:[#allocation5 + $0x36c] sm:$0xf]
    %v482 = vld [vmem:[#allocation5 + $0x370] sm:$0xf]
    %v483 = vld [vmem:[#allocation5 + $0x374] sm:$0xf]
    %v484 = vld [vmem:[#allocation5 + $0x378] sm:$0xf]
    %v485 = vld [vmem:[#allocation5 + $0x37c] sm:$0xf]
    %v486 = vld [vmem:[#allocation5 + $0x380] sm:$0xf]
    %v487 = vld [vmem:[#allocation5 + $0x384] sm:$0xf]
    %v488 = vld [vmem:[#allocation5 + $0x388] sm:$0xf]
    %v489 = vld [vmem:[#allocation5 + $0x38c] sm:$0xf]
    %v490 = vld [vmem:[#allocation5 + $0x390] sm:$0xf]
    %v491 = vld [vmem:[#allocation5 + $0x394] sm:$0xf]
    %v492 = vld [vmem:[#allocation5 + $0x398] sm:$0xf]
    %v493 = vld [vmem:[#allocation5 + $0x39c] sm:$0xf]
    %v494 = vld [vmem:[#allocation5 + $0x3a0] sm:$0xf]
    %v495 = vld [vmem:[#allocation5 + $0x3a4] sm:$0xf]
    %v496 = vld [vmem:[#allocation5 + $0x3a8] sm:$0xf]
    %v497 = vld [vmem:[#allocation5 + $0x3ac] sm:$0xf]
    %v498 = vld [vmem:[#allocation5 + $0x3b0] sm:$0xf]
    %v499 = vld [vmem:[#allocation5 + $0x3b4] sm:$0xf]
    %v500 = vld [vmem:[#allocation5 + $0x3b8] sm:$0xf]
    %v501 = vld [vmem:[#allocation5 + $0x3bc] sm:$0xf]
    %v502 = vld [vmem:[#allocation5 + $0x3c0] sm:$0xf]
    %v503 = vld [vmem:[#allocation5 + $0x3c4] sm:$0xf]
    %v504 = vld [vmem:[#allocation5 + $0x3c8] sm:$0xf]
    %v505 = vld [vmem:[#allocation5 + $0x3cc] sm:$0xf]
    %v506 = vld [vmem:[#allocation5 + $0x3d0] sm:$0xf]
    %v507 = vld [vmem:[#allocation5 + $0x3d4] sm:$0xf]
    %v508 = vld [vmem:[#allocation5 + $0x3d8] sm:$0xf]
    %v509 = vld [vmem:[#allocation5 + $0x3dc] sm:$0xf]
    %v510 = vld [vmem:[#allocation5 + $0x3e0] sm:$0xf]
    %v511 = vld [vmem:[#allocation5 + $0x3e4] sm:$0xf]
    %v512 = vld [vmem:[#allocation5 + $0x3e8] sm:$0xf]
    %v513 = vld [vmem:[#allocation5 + $0x3ec] sm:$0xf]
    %v514 = vld [vmem:[#allocation5 + $0x3f0] sm:$0xf]
    %v515 = vld [vmem:[#allocation5 + $0x3f4] sm:$0xf]
    %v516 = vld [vmem:[#allocation5 + $0x3f8] sm:$0xf]
    %v517 = vld [vmem:[#allocation5 + $0x3fc] sm:$0xf]
    %v518 = vld [vmem:[#allocation5 + $0x400] sm:$0xf]
    %v519 = vld [vmem:[#allocation5 + $0x404] sm:$0xf]
    %v520 = vld [vmem:[#allocation5 + $0x408] sm:$0xf]
    %v521 = vld [vmem:[#allocation5 + $0x40c] sm:$0xf]
    %v522 = vld [vmem:[#allocation5 + $0x410] sm:$0xf]
    %v523 = vld [vmem:[#allocation5 + $0x414] sm:$0xf]
    %v524 = vld [vmem:[#allocation5 + $0x418] sm:$0xf]
    %v525 = vld [vmem:[#allocation5 + $0x41c] sm:$0xf]
    %v526 = vld [vmem:[#allocation5 + $0x420] sm:$0xf]
    %v527 = vld [vmem:[#allocation5 + $0x424] sm:$0xf]
    %v528 = vld [vmem:[#allocation5 + $0x428] sm:$0xf]
    %v529 = vld [vmem:[#allocation5 + $0x42c] sm:$0xf]
    %v530 = vld [vmem:[#allocation5 + $0x430] sm:$0xf]
    %v531 = vld [vmem:[#allocation5 + $0x434] sm:$0xf]
    %v532 = vld [vmem:[#allocation5 + $0x438] sm:$0xf]
    %v533 = vld [vmem:[#allocation5 + $0x43c] sm:$0xf]
    %v534 = vld [vmem:[#allocation5 + $0x440] sm:$0xf]
    %v535 = vld [vmem:[#allocation5 + $0x444] sm:$0xf]
    %v536 = vld [vmem:[#allocation5 + $0x448] sm:$0xf]
    %v537 = vld [vmem:[#allocation5 + $0x44c] sm:$0xf]
    %v538 = vld [vmem:[#allocation5 + $0x450] sm:$0xf]
    %v539 = vld [vmem:[#allocation5 + $0x454] sm:$0xf]
    %v540 = vld [vmem:[#allocation5 + $0x458] sm:$0xf]
    %v541 = vld [vmem:[#allocation5 + $0x45c] sm:$0xf]
    %v542 = vld [vmem:[#allocation5 + $0x460] sm:$0xf]
    %v543 = vld [vmem:[#allocation5 + $0x464] sm:$0xf]
    %v544 = vld [vmem:[#allocation5 + $0x468] sm:$0xf]
    %v545 = vld [vmem:[#allocation5 + $0x46c] sm:$0xf]
    %v546 = vld [vmem:[#allocation5 + $0x470] sm:$0xf]
    %v547 = vld [vmem:[#allocation5 + $0x474] sm:$0xf]
    %v548 = vld [vmem:[#allocation5 + $0x478] sm:$0xf]
    %v549 = vld [vmem:[#allocation5 + $0x47c] sm:$0xf]
    %v550 = vld [vmem:[#allocation5 + $0x480] sm:$0xf]
    %v551 = vld [vmem:[#allocation5 + $0x484] sm:$0xf]
    %v552 = vld [vmem:[#allocation5 + $0x488] sm:$0xf]
    %v553 = vld [vmem:[#allocation5 + $0x48c] sm:$0xf]
    %v554 = vld [vmem:[#allocation5 + $0x490] sm:$0xf]
    %v555 = vld [vmem:[#allocation5 + $0x494] sm:$0xf]
    %v556 = vld [vmem:[#allocation5 + $0x498] sm:$0xf]
    %v557 = vld [vmem:[#allocation5 + $0x49c] sm:$0xf]
    %v558 = vld [vmem:[#allocation5 + $0x4a0] sm:$0xf]
    %v559 = vld [vmem:[#allocation5 + $0x4a4] sm:$0xf]
    %v560 = vld [vmem:[#allocation5 + $0x4a8] sm:$0xf]
    %v561 = vld [vmem:[#allocation5 + $0x4ac] sm:$0xf]
    %v562 = vld [vmem:[#allocation5 + $0x4b0] sm:$0xf]
    %v563 = vld [vmem:[#allocation5 + $0x4b4] sm:$0xf]
    %v564 = vld [vmem:[#allocation5 + $0x4b8] sm:$0xf]
    %v565 = vld [vmem:[#allocation5 + $0x4bc] sm:$0xf]
    %v566 = vld [vmem:[#allocation5 + $0x4c0] sm:$0xf]
    %v567 = vld [vmem:[#allocation5 + $0x4c4] sm:$0xf]
    %v568 = vld [vmem:[#allocation5 + $0x4c8] sm:$0xf]
    %v569 = vld [vmem:[#allocation5 + $0x4cc] sm:$0xf]
    %v570 = vld [vmem:[#allocation5 + $0x4d0] sm:$0xf]
    %v571 = vld [vmem:[#allocation5 + $0x4d4] sm:$0xf]
    %v572 = vld [vmem:[#allocation5 + $0x4d8] sm:$0xf]
    %v573 = vld [vmem:[#allocation5 + $0x4dc] sm:$0xf]
    %v574 = vld [vmem:[#allocation5 + $0x4e0] sm:$0xf]
    %v575 = vld [vmem:[#allocation5 + $0x4e4] sm:$0xf]
    %v576 = vld [vmem:[#allocation5 + $0x4e8] sm:$0xf]
    %v577 = vld [vmem:[#allocation5 + $0x4ec] sm:$0xf]
    %v578 = vld [vmem:[#allocation5 + $0x4f0] sm:$0xf]
    %v579 = vld [vmem:[#allocation5 + $0x4f4] sm:$0xf]
    %v580 = vld [vmem:[#allocation5 + $0x4f8] sm:$0xf]
    %v581 = vld [vmem:[#allocation5 + $0x4fc] sm:$0xf]
    %v582 = vld [vmem:[#allocation5 + $0x500] sm:$0xf]
    %v583 = vld [vmem:[#allocation5 + $0x504] sm:$0xf]
    %v584 = vld [vmem:[#allocation5 + $0x508] sm:$0xf]
    %v585 = vld [vmem:[#allocation5 + $0x50c] sm:$0xf]
    %v586 = vld [vmem:[#allocation5 + $0x510] sm:$0xf]
    %v587 = vld [vmem:[#allocation5 + $0x514] sm:$0xf]
    %v588 = vld [vmem:[#allocation5 + $0x518] sm:$0xf]
    %v589 = vld [vmem:[#allocation5 + $0x51c] sm:$0xf]
    %v590 = vld [vmem:[#allocation5 + $0x520] sm:$0xf]
    %v591 = vld [vmem:[#allocation5 + $0x524] sm:$0xf]
    %v592 = vld [vmem:[#allocation5 + $0x528] sm:$0xf]
    %v593 = vld [vmem:[#allocation5 + $0x52c] sm:$0xf]
    %v594 = vld [vmem:[#allocation5 + $0x530] sm:$0xf]
    %v595 = vld [vmem:[#allocation5 + $0x534] sm:$0xf]
    %v596 = vld [vmem:[#allocation5 + $0x538] sm:$0xf]
    %v597 = vld [vmem:[#allocation5 + $0x53c] sm:$0xf]
    %v598 = vld [vmem:[#allocation5 + $0x540] sm:$0xf]
    %v599 = vld [vmem:[#allocation5 + $0x544] sm:$0xf]
    %v600 = vld [vmem:[#allocation5 + $0x548] sm:$0xf]
    %v601 = vld [vmem:[#allocation5 + $0x54c] sm:$0xf]
    %v602 = vld [vmem:[#allocation5 + $0x550] sm:$0xf]
    %v603 = vld [vmem:[#allocation5 + $0x554] sm:$0xf]
    %v604 = vld [vmem:[#allocation5 + $0x558] sm:$0xf]
    %v605 = vld [vmem:[#allocation5 + $0x55c] sm:$0xf]
    %v606 = vld [vmem:[#allocation5 + $0x560] sm:$0xf]
    %v607 = vld [vmem:[#allocation5 + $0x564] sm:$0xf]
    %v608 = vld [vmem:[#allocation5 + $0x568] sm:$0xf]
    %v609 = vld [vmem:[#allocation5 + $0x56c] sm:$0xf]
    %v610 = vld [vmem:[#allocation5 + $0x570] sm:$0xf]
    %v611 = vld [vmem:[#allocation5 + $0x574] sm:$0xf]
    %v612 = vld [vmem:[#allocation5 + $0x578] sm:$0xf]
    %v613 = vld [vmem:[#allocation5 + $0x57c] sm:$0xf]
    %v614 = vld [vmem:[#allocation5 + $0x580] sm:$0xf]
    %v615 = vld [vmem:[#allocation5 + $0x584] sm:$0xf]
    %v616 = vld [vmem:[#allocation5 + $0x588] sm:$0xf]
    %v617 = vld [vmem:[#allocation5 + $0x58c] sm:$0xf]
    %v618 = vld [vmem:[#allocation5 + $0x590] sm:$0xf]
    %v619 = vld [vmem:[#allocation5 + $0x594] sm:$0xf]
    %v620 = vld [vmem:[#allocation5 + $0x598] sm:$0xf]
    %v621 = vld [vmem:[#allocation5 + $0x59c] sm:$0xf]
    %v622 = vld [vmem:[#allocation5 + $0x5a0] sm:$0xf]
    %v623 = vld [vmem:[#allocation5 + $0x5a4] sm:$0xf]
    %v624 = vld [vmem:[#allocation5 + $0x5a8] sm:$0xf]
    %v625 = vld [vmem:[#allocation5 + $0x5ac] sm:$0xf]
    %v626 = vld [vmem:[#allocation5 + $0x5b0] sm:$0xf]
    %v627 = vld [vmem:[#allocation5 + $0x5b4] sm:$0xf]
    %v628 = vld [vmem:[#allocation5 + $0x5b8] sm:$0xf]
    %v629 = vld [vmem:[#allocation5 + $0x5bc] sm:$0xf]
    %v630 = vld [vmem:[#allocation5 + $0x5c0] sm:$0xf]
    %v631 = vld [vmem:[#allocation5 + $0x5c4] sm:$0xf]
    %v632 = vld [vmem:[#allocation5 + $0x5c8] sm:$0xf]
    %v633 = vld [vmem:[#allocation5 + $0x5cc] sm:$0xf]
    %v634 = vld [vmem:[#allocation5 + $0x5d0] sm:$0xf]
    %v635 = vld [vmem:[#allocation5 + $0x5d4] sm:$0xf]
    %v636 = vld [vmem:[#allocation5 + $0x5d8] sm:$0xf]
    %v637 = vld [vmem:[#allocation5 + $0x5dc] sm:$0xf]
    %v638 = vld [vmem:[#allocation5 + $0x5e0] sm:$0xf]
    %v639 = vld [vmem:[#allocation5 + $0x5e4] sm:$0xf]
    %v640 = vld [vmem:[#allocation5 + $0x5e8] sm:$0xf]
    %v641 = vld [vmem:[#allocation5 + $0x5ec] sm:$0xf]
    %v642 = vld [vmem:[#allocation5 + $0x5f0] sm:$0xf]
    %v643 = vld [vmem:[#allocation5 + $0x5f4] sm:$0xf]
    %v644 = vld [vmem:[#allocation5 + $0x5f8] sm:$0xf]
    %v645 = vld [vmem:[#allocation5 + $0x5fc] sm:$0xf]
    %v646 = vld [vmem:[%s2] sm:$0x1]
    %v648 = vlaneseq
    %v649 = vshrl.u32 %v648, 7
    %v650 = vsub.s32 0, %v649
    %v651 = vrot.slane %v646, %v650
    %v1037 = vunpack.c.l.b16 %v262
    %v1038 = vunpack.c.l.b16 %v263
    %v1039 = vunpack.c.l.b16 %v264
    %v1040 = vunpack.c.l.b16 %v265
    %v1041 = vunpack.c.l.b16 %v266
    %v1042 = vunpack.c.l.b16 %v267
    %v1043 = vunpack.c.l.b16 %v268
    %v1044 = vunpack.c.l.b16 %v269
    %v1045 = vunpack.c.l.b16 %v270
    %v1046 = vunpack.c.l.b16 %v271
    %v1047 = vunpack.c.l.b16 %v272
    %v1048 = vunpack.c.l.b16 %v273
    %v1049 = vunpack.c.l.b16 %v274
    %v1050 = vunpack.c.l.b16 %v275
    %v1051 = vunpack.c.l.b16 %v276
    %v1052 = vunpack.c.l.b16 %v277
    %v1053 = vunpack.c.l.b16 %v278
    %v1054 = vunpack.c.l.b16 %v279
    %v1055 = vunpack.c.l.b16 %v280
    %v1056 = vunpack.c.l.b16 %v281
    %v1057 = vunpack.c.l.b16 %v282
    %v1058 = vunpack.c.l.b16 %v283
    %v1059 = vunpack.c.l.b16 %v284
    %v1060 = vunpack.c.l.b16 %v285
    %v1061 = vunpack.c.l.b16 %v286
    %v1062 = vunpack.c.l.b16 %v287
    %v1063 = vunpack.c.l.b16 %v288
    %v1064 = vunpack.c.l.b16 %v289
    %v1065 = vunpack.c.l.b16 %v290
    %v1066 = vunpack.c.l.b16 %v291
    %v1067 = vunpack.c.l.b16 %v292
    %v1068 = vunpack.c.l.b16 %v293
    %v1069 = vunpack.c.l.b16 %v294
    %v1070 = vunpack.c.l.b16 %v295
    %v1071 = vunpack.c.l.b16 %v296
    %v1072 = vunpack.c.l.b16 %v297
    %v1073 = vunpack.c.l.b16 %v298
    %v1074 = vunpack.c.l.b16 %v299
    %v1075 = vunpack.c.l.b16 %v300
    %v1076 = vunpack.c.l.b16 %v301
    %v1077 = vunpack.c.l.b16 %v302
    %v1078 = vunpack.c.l.b16 %v303
    %v1079 = vunpack.c.l.b16 %v304
    %v1080 = vunpack.c.l.b16 %v305
    %v1081 = vunpack.c.l.b16 %v306
    %v1082 = vunpack.c.l.b16 %v307
    %v1083 = vunpack.c.l.b16 %v308
    %v1084 = vunpack.c.l.b16 %v309
    %v1085 = vunpack.c.l.b16 %v310
    %v1086 = vunpack.c.l.b16 %v311
    %v1087 = vunpack.c.l.b16 %v312
    %v1088 = vunpack.c.l.b16 %v313
    %v1089 = vunpack.c.l.b16 %v314
    %v1090 = vunpack.c.l.b16 %v315
    %v1091 = vunpack.c.l.b16 %v316
    %v1092 = vunpack.c.l.b16 %v317
    %v1093 = vunpack.c.l.b16 %v318
    %v1094 = vunpack.c.l.b16 %v319
    %v1095 = vunpack.c.l.b16 %v320
    %v1096 = vunpack.c.l.b16 %v321
    %v1097 = vunpack.c.l.b16 %v322
    %v1098 = vunpack.c.l.b16 %v323
    %v1099 = vunpack.c.l.b16 %v324
    %v1100 = vunpack.c.l.b16 %v325
    %v1101 = vunpack.c.l.b16 %v326
    %v1102 = vunpack.c.l.b16 %v327
    %v1103 = vunpack.c.l.b16 %v328
    %v1104 = vunpack.c.l.b16 %v329
    %v1105 = vunpack.c.l.b16 %v330
    %v1106 = vunpack.c.l.b16 %v331
    %v1107 = vunpack.c.l.b16 %v332
    %v1108 = vunpack.c.l.b16 %v333
    %v1109 = vunpack.c.l.b16 %v334
    %v1110 = vunpack.c.l.b16 %v335
    %v1111 = vunpack.c.l.b16 %v336
    %v1112 = vunpack.c.l.b16 %v337
    %v1113 = vunpack.c.l.b16 %v338
    %v1114 = vunpack.c.l.b16 %v339
    %v1115 = vunpack.c.l.b16 %v340
    %v1116 = vunpack.c.l.b16 %v341
    %v1117 = vunpack.c.l.b16 %v342
    %v1118 = vunpack.c.l.b16 %v343
    %v1119 = vunpack.c.l.b16 %v344
    %v1120 = vunpack.c.l.b16 %v345
    %v1121 = vunpack.c.l.b16 %v346
    %v1122 = vunpack.c.l.b16 %v347
    %v1123 = vunpack.c.l.b16 %v348
    %v1124 = vunpack.c.l.b16 %v349
    %v1125 = vunpack.c.l.b16 %v350
    %v1126 = vunpack.c.l.b16 %v351
    %v1127 = vunpack.c.l.b16 %v352
    %v1128 = vunpack.c.l.b16 %v353
    %v1129 = vunpack.c.l.b16 %v354
    %v1130 = vunpack.c.l.b16 %v355
    %v1131 = vunpack.c.l.b16 %v356
    %v1132 = vunpack.c.l.b16 %v357
    %v1133 = vunpack.c.l.b16 %v358
    %v1134 = vunpack.c.l.b16 %v359
    %v1135 = vunpack.c.l.b16 %v360
    %v1136 = vunpack.c.l.b16 %v361
    %v1137 = vunpack.c.l.b16 %v362
    %v1138 = vunpack.c.l.b16 %v363
    %v1139 = vunpack.c.l.b16 %v364
    %v1140 = vunpack.c.l.b16 %v365
    %v1141 = vunpack.c.l.b16 %v366
    %v1142 = vunpack.c.l.b16 %v367
    %v1143 = vunpack.c.l.b16 %v368
    %v1144 = vunpack.c.l.b16 %v369
    %v1145 = vunpack.c.l.b16 %v370
    %v1146 = vunpack.c.l.b16 %v371
    %v1147 = vunpack.c.l.b16 %v372
    %v1148 = vunpack.c.l.b16 %v373
    %v1149 = vunpack.c.l.b16 %v374
    %v1150 = vunpack.c.l.b16 %v375
    %v1151 = vunpack.c.l.b16 %v376
    %v1152 = vunpack.c.l.b16 %v377
    %v1153 = vunpack.c.l.b16 %v378
    %v1154 = vunpack.c.l.b16 %v379
    %v1155 = vunpack.c.l.b16 %v380
    %v1156 = vunpack.c.l.b16 %v381
    %v1157 = vunpack.c.l.b16 %v382
    %v1158 = vunpack.c.l.b16 %v383
    %v1159 = vunpack.c.l.b16 %v384
    %v1160 = vunpack.c.l.b16 %v385
    %v1161 = vunpack.c.l.b16 %v386
    %v1162 = vunpack.c.l.b16 %v387
    %v1163 = vunpack.c.l.b16 %v388
    %v1164 = vunpack.c.l.b16 %v389
    %v1165 = vunpack.c.l.b16 %v390
    %v1166 = vunpack.c.l.b16 %v391
    %v1167 = vunpack.c.l.b16 %v392
    %v1168 = vunpack.c.l.b16 %v393
    %v1169 = vunpack.c.l.b16 %v394
    %v1170 = vunpack.c.l.b16 %v395
    %v1171 = vunpack.c.l.b16 %v396
    %v1172 = vunpack.c.l.b16 %v397
    %v1173 = vunpack.c.l.b16 %v398
    %v1174 = vunpack.c.l.b16 %v399
    %v1175 = vunpack.c.l.b16 %v400
    %v1176 = vunpack.c.l.b16 %v401
    %v1177 = vunpack.c.l.b16 %v402
    %v1178 = vunpack.c.l.b16 %v403
    %v1179 = vunpack.c.l.b16 %v404
    %v1180 = vunpack.c.l.b16 %v405
    %v1181 = vunpack.c.l.b16 %v406
    %v1182 = vunpack.c.l.b16 %v407
    %v1183 = vunpack.c.l.b16 %v408
    %v1184 = vunpack.c.l.b16 %v409
    %v1185 = vunpack.c.l.b16 %v410
    %v1186 = vunpack.c.l.b16 %v411
    %v1187 = vunpack.c.l.b16 %v412
    %v1188 = vunpack.c.l.b16 %v413
    %v1189 = vunpack.c.l.b16 %v414
    %v1190 = vunpack.c.l.b16 %v415
    %v1191 = vunpack.c.l.b16 %v416
    %v1192 = vunpack.c.l.b16 %v417
    %v1193 = vunpack.c.l.b16 %v418
    %v1194 = vunpack.c.l.b16 %v419
    %v1195 = vunpack.c.l.b16 %v420
    %v1196 = vunpack.c.l.b16 %v421
    %v1197 = vunpack.c.l.b16 %v422
    %v1198 = vunpack.c.l.b16 %v423
    %v1199 = vunpack.c.l.b16 %v424
    %v1200 = vunpack.c.l.b16 %v425
    %v1201 = vunpack.c.l.b16 %v426
    %v1202 = vunpack.c.l.b16 %v427
    %v1203 = vunpack.c.l.b16 %v428
    %v1204 = vunpack.c.l.b16 %v429
    %v1205 = vunpack.c.l.b16 %v430
    %v1206 = vunpack.c.l.b16 %v431
    %v1207 = vunpack.c.l.b16 %v432
    %v1208 = vunpack.c.l.b16 %v433
    %v1209 = vunpack.c.l.b16 %v434
    %v1210 = vunpack.c.l.b16 %v435
    %v1211 = vunpack.c.l.b16 %v436
    %v1212 = vunpack.c.l.b16 %v437
    %v1213 = vunpack.c.l.b16 %v438
    %v1214 = vunpack.c.l.b16 %v439
    %v1215 = vunpack.c.l.b16 %v440
    %v1216 = vunpack.c.l.b16 %v441
    %v1217 = vunpack.c.l.b16 %v442
    %v1218 = vunpack.c.l.b16 %v443
    %v1219 = vunpack.c.l.b16 %v444
    %v1220 = vunpack.c.l.b16 %v445
    %v1221 = vunpack.c.l.b16 %v446
    %v1222 = vunpack.c.l.b16 %v447
    %v1223 = vunpack.c.l.b16 %v448
    %v1224 = vunpack.c.l.b16 %v449
    %v1225 = vunpack.c.l.b16 %v450
    %v1226 = vunpack.c.l.b16 %v451
    %v1227 = vunpack.c.l.b16 %v452
    %v1228 = vunpack.c.l.b16 %v453
    %v1229 = vunpack.c.l.b16 %v454
    %v1230 = vunpack.c.l.b16 %v455
    %v1231 = vunpack.c.l.b16 %v456
    %v1232 = vunpack.c.l.b16 %v457
    %v1233 = vunpack.c.l.b16 %v458
    %v1234 = vunpack.c.l.b16 %v459
    %v1235 = vunpack.c.l.b16 %v460
    %v1236 = vunpack.c.l.b16 %v461
    %v1237 = vunpack.c.l.b16 %v462
    %v1238 = vunpack.c.l.b16 %v463
    %v1239 = vunpack.c.l.b16 %v464
    %v1240 = vunpack.c.l.b16 %v465
    %v1241 = vunpack.c.l.b16 %v466
    %v1242 = vunpack.c.l.b16 %v467
    %v1243 = vunpack.c.l.b16 %v468
    %v1244 = vunpack.c.l.b16 %v469
    %v1245 = vunpack.c.l.b16 %v470
    %v1246 = vunpack.c.l.b16 %v471
    %v1247 = vunpack.c.l.b16 %v472
    %v1248 = vunpack.c.l.b16 %v473
    %v1249 = vunpack.c.l.b16 %v474
    %v1250 = vunpack.c.l.b16 %v475
    %v1251 = vunpack.c.l.b16 %v476
    %v1252 = vunpack.c.l.b16 %v477
    %v1253 = vunpack.c.l.b16 %v478
    %v1254 = vunpack.c.l.b16 %v479
    %v1255 = vunpack.c.l.b16 %v480
    %v1256 = vunpack.c.l.b16 %v481
    %v1257 = vunpack.c.l.b16 %v482
    %v1258 = vunpack.c.l.b16 %v483
    %v1259 = vunpack.c.l.b16 %v484
    %v1260 = vunpack.c.l.b16 %v485
    %v1261 = vunpack.c.l.b16 %v486
    %v1262 = vunpack.c.l.b16 %v487
    %v1263 = vunpack.c.l.b16 %v488
    %v1264 = vunpack.c.l.b16 %v489
    %v1265 = vunpack.c.l.b16 %v490
    %v1266 = vunpack.c.l.b16 %v491
    %v1267 = vunpack.c.l.b16 %v492
    %v1268 = vunpack.c.l.b16 %v493
    %v1269 = vunpack.c.l.b16 %v494
    %v1270 = vunpack.c.l.b16 %v495
    %v1271 = vunpack.c.l.b16 %v496
    %v1272 = vunpack.c.l.b16 %v497
    %v1273 = vunpack.c.l.b16 %v498
    %v1274 = vunpack.c.l.b16 %v499
    %v1275 = vunpack.c.l.b16 %v500
    %v1276 = vunpack.c.l.b16 %v501
    %v1277 = vunpack.c.l.b16 %v502
    %v1278 = vunpack.c.l.b16 %v503
    %v1279 = vunpack.c.l.b16 %v504
    %v1280 = vunpack.c.l.b16 %v505
    %v1281 = vunpack.c.l.b16 %v506
    %v1282 = vunpack.c.l.b16 %v507
    %v1283 = vunpack.c.l.b16 %v508
    %v1284 = vunpack.c.l.b16 %v509
    %v1285 = vunpack.c.l.b16 %v510
    %v1286 = vunpack.c.l.b16 %v511
    %v1287 = vunpack.c.l.b16 %v512
    %v1288 = vunpack.c.l.b16 %v513
    %v1289 = vunpack.c.l.b16 %v514
    %v1290 = vunpack.c.l.b16 %v515
    %v1291 = vunpack.c.l.b16 %v516
    %v1292 = vunpack.c.l.b16 %v517
    %v1293 = vunpack.c.l.b16 %v518
    %v1294 = vunpack.c.l.b16 %v519
    %v1295 = vunpack.c.l.b16 %v520
    %v1296 = vunpack.c.l.b16 %v521
    %v1297 = vunpack.c.l.b16 %v522
    %v1298 = vunpack.c.l.b16 %v523
    %v1299 = vunpack.c.l.b16 %v524
    %v1300 = vunpack.c.l.b16 %v525
    %v1301 = vunpack.c.l.b16 %v526
    %v1302 = vunpack.c.l.b16 %v527
    %v1303 = vunpack.c.l.b16 %v528
    %v1304 = vunpack.c.l.b16 %v529
    %v1305 = vunpack.c.l.b16 %v530
    %v1306 = vunpack.c.l.b16 %v531
    %v1307 = vunpack.c.l.b16 %v532
    %v1308 = vunpack.c.l.b16 %v533
    %v1309 = vunpack.c.l.b16 %v534
    %v1310 = vunpack.c.l.b16 %v535
    %v1311 = vunpack.c.l.b16 %v536
    %v1312 = vunpack.c.l.b16 %v537
    %v1313 = vunpack.c.l.b16 %v538
    %v1314 = vunpack.c.l.b16 %v539
    %v1315 = vunpack.c.l.b16 %v540
    %v1316 = vunpack.c.l.b16 %v541
    %v1317 = vunpack.c.l.b16 %v542
    %v1318 = vunpack.c.l.b16 %v543
    %v1319 = vunpack.c.l.b16 %v544
    %v1320 = vunpack.c.l.b16 %v545
    %v1321 = vunpack.c.l.b16 %v546
    %v1322 = vunpack.c.l.b16 %v547
    %v1323 = vunpack.c.l.b16 %v548
    %v1324 = vunpack.c.l.b16 %v549
    %v1325 = vunpack.c.l.b16 %v550
    %v1326 = vunpack.c.l.b16 %v551
    %v1327 = vunpack.c.l.b16 %v552
    %v1328 = vunpack.c.l.b16 %v553
    %v1329 = vunpack.c.l.b16 %v554
    %v1330 = vunpack.c.l.b16 %v555
    %v1331 = vunpack.c.l.b16 %v556
    %v1332 = vunpack.c.l.b16 %v557
    %v1333 = vunpack.c.l.b16 %v558
    %v1334 = vunpack.c.l.b16 %v559
    %v1335 = vunpack.c.l.b16 %v560
    %v1336 = vunpack.c.l.b16 %v561
    %v1337 = vunpack.c.l.b16 %v562
    %v1338 = vunpack.c.l.b16 %v563
    %v1339 = vunpack.c.l.b16 %v564
    %v1340 = vunpack.c.l.b16 %v565
    %v1341 = vunpack.c.l.b16 %v566
    %v1342 = vunpack.c.l.b16 %v567
    %v1343 = vunpack.c.l.b16 %v568
    %v1344 = vunpack.c.l.b16 %v569
    %v1345 = vunpack.c.l.b16 %v570
    %v1346 = vunpack.c.l.b16 %v571
    %v1347 = vunpack.c.l.b16 %v572
    %v1348 = vunpack.c.l.b16 %v573
    %v1349 = vunpack.c.l.b16 %v574
    %v1350 = vunpack.c.l.b16 %v575
    %v1351 = vunpack.c.l.b16 %v576
    %v1352 = vunpack.c.l.b16 %v577
    %v1353 = vunpack.c.l.b16 %v578
    %v1354 = vunpack.c.l.b16 %v579
    %v1355 = vunpack.c.l.b16 %v580
    %v1356 = vunpack.c.l.b16 %v581
    %v1357 = vunpack.c.l.b16 %v582
    %v1358 = vunpack.c.l.b16 %v583
    %v1359 = vunpack.c.l.b16 %v584
    %v1360 = vunpack.c.l.b16 %v585
    %v1361 = vunpack.c.l.b16 %v586
    %v1362 = vunpack.c.l.b16 %v587
    %v1363 = vunpack.c.l.b16 %v588
    %v1364 = vunpack.c.l.b16 %v589
    %v1365 = vunpack.c.l.b16 %v590
    %v1366 = vunpack.c.l.b16 %v591
    %v1367 = vunpack.c.l.b16 %v592
    %v1368 = vunpack.c.l.b16 %v593
    %v1369 = vunpack.c.l.b16 %v594
    %v1370 = vunpack.c.l.b16 %v595
    %v1371 = vunpack.c.l.b16 %v596
    %v1372 = vunpack.c.l.b16 %v597
    %v1373 = vunpack.c.l.b16 %v598
    %v1374 = vunpack.c.l.b16 %v599
    %v1375 = vunpack.c.l.b16 %v600
    %v1376 = vunpack.c.l.b16 %v601
    %v1377 = vunpack.c.l.b16 %v602
    %v1378 = vunpack.c.l.b16 %v603
    %v1379 = vunpack.c.l.b16 %v604
    %v1380 = vunpack.c.l.b16 %v605
    %v1381 = vunpack.c.l.b16 %v606
    %v1382 = vunpack.c.l.b16 %v607
    %v1383 = vunpack.c.l.b16 %v608
    %v1384 = vunpack.c.l.b16 %v609
    %v1385 = vunpack.c.l.b16 %v610
    %v1386 = vunpack.c.l.b16 %v611
    %v1387 = vunpack.c.l.b16 %v612
    %v1388 = vunpack.c.l.b16 %v613
    %v1389 = vunpack.c.l.b16 %v614
    %v1390 = vunpack.c.l.b16 %v615
    %v1391 = vunpack.c.l.b16 %v616
    %v1392 = vunpack.c.l.b16 %v617
    %v1393 = vunpack.c.l.b16 %v618
    %v1394 = vunpack.c.l.b16 %v619
    %v1395 = vunpack.c.l.b16 %v620
    %v1396 = vunpack.c.l.b16 %v621
    %v1397 = vunpack.c.l.b16 %v622
    %v1398 = vunpack.c.l.b16 %v623
    %v1399 = vunpack.c.l.b16 %v624
    %v1400 = vunpack.c.l.b16 %v625
    %v1401 = vunpack.c.l.b16 %v626
    %v1402 = vunpack.c.l.b16 %v627
    %v1403 = vunpack.c.l.b16 %v628
    %v1404 = vunpack.c.l.b16 %v629
    %v1405 = vunpack.c.l.b16 %v630
    %v1406 = vunpack.c.l.b16 %v631
    %v1407 = vunpack.c.l.b16 %v632
    %v1408 = vunpack.c.l.b16 %v633
    %v1409 = vunpack.c.l.b16 %v634
    %v1410 = vunpack.c.l.b16 %v635
    %v1411 = vunpack.c.l.b16 %v636
    %v1412 = vunpack.c.l.b16 %v637
    %v1413 = vunpack.c.l.b16 %v638
    %v1414 = vunpack.c.l.b16 %v639
    %v1415 = vunpack.c.l.b16 %v640
    %v1416 = vunpack.c.l.b16 %v641
    %v1417 = vunpack.c.l.b16 %v642
    %v1418 = vunpack.c.l.b16 %v643
    %v1419 = vunpack.c.l.b16 %v644
    %v1420 = vunpack.c.l.b16 %v645
    %v1421 = vpack.c.b16 %v1038, %v1037
    %v1422 = vpack.c.b16 %v1040, %v1039
    %v1423 = vpack.c.b16 %v1042, %v1041
    %v1424 = vpack.c.b16 %v1044, %v1043
    %v1425 = vpack.c.b16 %v1046, %v1045
    %v1426 = vpack.c.b16 %v1048, %v1047
    %v1427 = vpack.c.b16 %v1050, %v1049
    %v1428 = vpack.c.b16 %v1052, %v1051
    %v1429 = vpack.c.b16 %v1054, %v1053
    %v1430 = vpack.c.b16 %v1056, %v1055
    %v1431 = vpack.c.b16 %v1058, %v1057
    %v1432 = vpack.c.b16 %v1060, %v1059
    %v1433 = vpack.c.b16 %v1062, %v1061
    %v1434 = vpack.c.b16 %v1064, %v1063
    %v1435 = vpack.c.b16 %v1066, %v1065
    %v1436 = vpack.c.b16 %v1068, %v1067
    %v1437 = vpack.c.b16 %v1070, %v1069
    %v1438 = vpack.c.b16 %v1072, %v1071
    %v1439 = vpack.c.b16 %v1074, %v1073
    %v1440 = vpack.c.b16 %v1076, %v1075
    %v1441 = vpack.c.b16 %v1078, %v1077
    %v1442 = vpack.c.b16 %v1080, %v1079
    %v1443 = vpack.c.b16 %v1082, %v1081
    %v1444 = vpack.c.b16 %v1084, %v1083
    %v1445 = vpack.c.b16 %v1086, %v1085
    %v1446 = vpack.c.b16 %v1088, %v1087
    %v1447 = vpack.c.b16 %v1090, %v1089
    %v1448 = vpack.c.b16 %v1092, %v1091
    %v1449 = vpack.c.b16 %v1094, %v1093
    %v1450 = vpack.c.b16 %v1096, %v1095
    %v1451 = vpack.c.b16 %v1098, %v1097
    %v1452 = vpack.c.b16 %v1100, %v1099
    %v1453 = vpack.c.b16 %v1102, %v1101
    %v1454 = vpack.c.b16 %v1104, %v1103
    %v1455 = vpack.c.b16 %v1106, %v1105
    %v1456 = vpack.c.b16 %v1108, %v1107
    %v1457 = vpack.c.b16 %v1110, %v1109
    %v1458 = vpack.c.b16 %v1112, %v1111
    %v1459 = vpack.c.b16 %v1114, %v1113
    %v1460 = vpack.c.b16 %v1116, %v1115
    %v1461 = vpack.c.b16 %v1118, %v1117
    %v1462 = vpack.c.b16 %v1120, %v1119
    %v1463 = vpack.c.b16 %v1122, %v1121
    %v1464 = vpack.c.b16 %v1124, %v1123
    %v1465 = vpack.c.b16 %v1126, %v1125
    %v1466 = vpack.c.b16 %v1128, %v1127
    %v1467 = vpack.c.b16 %v1130, %v1129
    %v1468 = vpack.c.b16 %v1132, %v1131
    %v1469 = vpack.c.b16 %v1134, %v1133
    %v1470 = vpack.c.b16 %v1136, %v1135
    %v1471 = vpack.c.b16 %v1138, %v1137
    %v1472 = vpack.c.b16 %v1140, %v1139
    %v1473 = vpack.c.b16 %v1142, %v1141
    %v1474 = vpack.c.b16 %v1144, %v1143
    %v1475 = vpack.c.b16 %v1146, %v1145
    %v1476 = vpack.c.b16 %v1148, %v1147
    %v1477 = vpack.c.b16 %v1150, %v1149
    %v1478 = vpack.c.b16 %v1152, %v1151
    %v1479 = vpack.c.b16 %v1154, %v1153
    %v1480 = vpack.c.b16 %v1156, %v1155
    %v1481 = vpack.c.b16 %v1158, %v1157
    %v1482 = vpack.c.b16 %v1160, %v1159
    %v1483 = vpack.c.b16 %v1162, %v1161
    %v1484 = vpack.c.b16 %v1164, %v1163
    %v1485 = vpack.c.b16 %v1166, %v1165
    %v1486 = vpack.c.b16 %v1168, %v1167
    %v1487 = vpack.c.b16 %v1170, %v1169
    %v1488 = vpack.c.b16 %v1172, %v1171
    %v1489 = vpack.c.b16 %v1174, %v1173
    %v1490 = vpack.c.b16 %v1176, %v1175
    %v1491 = vpack.c.b16 %v1178, %v1177
    %v1492 = vpack.c.b16 %v1180, %v1179
    %v1493 = vpack.c.b16 %v1182, %v1181
    %v1494 = vpack.c.b16 %v1184, %v1183
    %v1495 = vpack.c.b16 %v1186, %v1185
    %v1496 = vpack.c.b16 %v1188, %v1187
    %v1497 = vpack.c.b16 %v1190, %v1189
    %v1498 = vpack.c.b16 %v1192, %v1191
    %v1499 = vpack.c.b16 %v1194, %v1193
    %v1500 = vpack.c.b16 %v1196, %v1195
    %v1501 = vpack.c.b16 %v1198, %v1197
    %v1502 = vpack.c.b16 %v1200, %v1199
    %v1503 = vpack.c.b16 %v1202, %v1201
    %v1504 = vpack.c.b16 %v1204, %v1203
    %v1505 = vpack.c.b16 %v1206, %v1205
    %v1506 = vpack.c.b16 %v1208, %v1207
    %v1507 = vpack.c.b16 %v1210, %v1209
    %v1508 = vpack.c.b16 %v1212, %v1211
    %v1509 = vpack.c.b16 %v1214, %v1213
    %v1510 = vpack.c.b16 %v1216, %v1215
    %v1511 = vpack.c.b16 %v1218, %v1217
    %v1512 = vpack.c.b16 %v1220, %v1219
    %v1513 = vpack.c.b16 %v1222, %v1221
    %v1514 = vpack.c.b16 %v1224, %v1223
    %v1515 = vpack.c.b16 %v1226, %v1225
    %v1516 = vpack.c.b16 %v1228, %v1227
    %v1517 = vpack.c.b16 %v1230, %v1229
    %v1518 = vpack.c.b16 %v1232, %v1231
    %v1519 = vpack.c.b16 %v1234, %v1233
    %v1520 = vpack.c.b16 %v1236, %v1235
    %v1521 = vpack.c.b16 %v1238, %v1237
    %v1522 = vpack.c.b16 %v1240, %v1239
    %v1523 = vpack.c.b16 %v1242, %v1241
    %v1524 = vpack.c.b16 %v1244, %v1243
    %v1525 = vpack.c.b16 %v1246, %v1245
    %v1526 = vpack.c.b16 %v1248, %v1247
    %v1527 = vpack.c.b16 %v1250, %v1249
    %v1528 = vpack.c.b16 %v1252, %v1251
    %v1529 = vpack.c.b16 %v1254, %v1253
    %v1530 = vpack.c.b16 %v1256, %v1255
    %v1531 = vpack.c.b16 %v1258, %v1257
    %v1532 = vpack.c.b16 %v1260, %v1259
    %v1533 = vpack.c.b16 %v1262, %v1261
    %v1534 = vpack.c.b16 %v1264, %v1263
    %v1535 = vpack.c.b16 %v1266, %v1265
    %v1536 = vpack.c.b16 %v1268, %v1267
    %v1537 = vpack.c.b16 %v1270, %v1269
    %v1538 = vpack.c.b16 %v1272, %v1271
    %v1539 = vpack.c.b16 %v1274, %v1273
    %v1540 = vpack.c.b16 %v1276, %v1275
    %v1541 = vpack.c.b16 %v1278, %v1277
    %v1542 = vpack.c.b16 %v1280, %v1279
    %v1543 = vpack.c.b16 %v1282, %v1281
    %v1544 = vpack.c.b16 %v1284, %v1283
    %v1545 = vpack.c.b16 %v1286, %v1285
    %v1546 = vpack.c.b16 %v1288, %v1287
    %v1547 = vpack.c.b16 %v1290, %v1289
    %v1548 = vpack.c.b16 %v1292, %v1291
    %v1549 = vpack.c.b16 %v1294, %v1293
    %v1550 = vpack.c.b16 %v1296, %v1295
    %v1551 = vpack.c.b16 %v1298, %v1297
    %v1552 = vpack.c.b16 %v1300, %v1299
    %v1553 = vpack.c.b16 %v1302, %v1301
    %v1554 = vpack.c.b16 %v1304, %v1303
    %v1555 = vpack.c.b16 %v1306, %v1305
    %v1556 = vpack.c.b16 %v1308, %v1307
    %v1557 = vpack.c.b16 %v1310, %v1309
    %v1558 = vpack.c.b16 %v1312, %v1311
    %v1559 = vpack.c.b16 %v1314, %v1313
    %v1560 = vpack.c.b16 %v1316, %v1315
    %v1561 = vpack.c.b16 %v1318, %v1317
    %v1562 = vpack.c.b16 %v1320, %v1319
    %v1563 = vpack.c.b16 %v1322, %v1321
    %v1564 = vpack.c.b16 %v1324, %v1323
    %v1565 = vpack.c.b16 %v1326, %v1325
    %v1566 = vpack.c.b16 %v1328, %v1327
    %v1567 = vpack.c.b16 %v1330, %v1329
    %v1568 = vpack.c.b16 %v1332, %v1331
    %v1569 = vpack.c.b16 %v1334, %v1333
    %v1570 = vpack.c.b16 %v1336, %v1335
    %v1571 = vpack.c.b16 %v1338, %v1337
    %v1572 = vpack.c.b16 %v1340, %v1339
    %v1573 = vpack.c.b16 %v1342, %v1341
    %v1574 = vpack.c.b16 %v1344, %v1343
    %v1575 = vpack.c.b16 %v1346, %v1345
    %v1576 = vpack.c.b16 %v1348, %v1347
    %v1577 = vpack.c.b16 %v1350, %v1349
    %v1578 = vpack.c.b16 %v1352, %v1351
    %v1579 = vpack.c.b16 %v1354, %v1353
    %v1580 = vpack.c.b16 %v1356, %v1355
    %v1581 = vpack.c.b16 %v1358, %v1357
    %v1582 = vpack.c.b16 %v1360, %v1359
    %v1583 = vpack.c.b16 %v1362, %v1361
    %v1584 = vpack.c.b16 %v1364, %v1363
    %v1585 = vpack.c.b16 %v1366, %v1365
    %v1586 = vpack.c.b16 %v1368, %v1367
    %v1587 = vpack.c.b16 %v1370, %v1369
    %v1588 = vpack.c.b16 %v1372, %v1371
    %v1589 = vpack.c.b16 %v1374, %v1373
    %v1590 = vpack.c.b16 %v1376, %v1375
    %v1591 = vpack.c.b16 %v1378, %v1377
    %v1592 = vpack.c.b16 %v1380, %v1379
    %v1593 = vpack.c.b16 %v1382, %v1381
    %v1594 = vpack.c.b16 %v1384, %v1383
    %v1595 = vpack.c.b16 %v1386, %v1385
    %v1596 = vpack.c.b16 %v1388, %v1387
    %v1597 = vpack.c.b16 %v1390, %v1389
    %v1598 = vpack.c.b16 %v1392, %v1391
    %v1599 = vpack.c.b16 %v1394, %v1393
    %v1600 = vpack.c.b16 %v1396, %v1395
    %v1601 = vpack.c.b16 %v1398, %v1397
    %v1602 = vpack.c.b16 %v1400, %v1399
    %v1603 = vpack.c.b16 %v1402, %v1401
    %v1604 = vpack.c.b16 %v1404, %v1403
    %v1605 = vpack.c.b16 %v1406, %v1405
    %v1606 = vpack.c.b16 %v1408, %v1407
    %v1607 = vpack.c.b16 %v1410, %v1409
    %v1608 = vpack.c.b16 %v1412, %v1411
    %v1609 = vpack.c.b16 %v1414, %v1413
    %v1610 = vpack.c.b16 %v1416, %v1415
    %v1611 = vpack.c.b16 %v1418, %v1417
    %v1612 = vpack.c.b16 %v1420, %v1419
    %1805 = vmatprep.subr.bf16.mxu0 0
    %1806 = vmatpush1.bf16.msra.mxu0 %v1421
    %1807 = vmatprep.subr.bf16.mxu0 0
    %1808 = vmatpush1.bf16.msra.mxu0 %v1422
    %1809 = vmatprep.subr.bf16.mxu0 0
    %1810 = vmatpush1.bf16.msra.mxu0 %v1423
    %1811 = vmatprep.subr.bf16.mxu0 0
    %1812 = vmatpush1.bf16.msra.mxu0 %v1424
    %1813 = vmatprep.subr.bf16.mxu0 0
    %1814 = vmatpush1.bf16.msra.mxu0 %v1425
    %1815 = vmatprep.subr.bf16.mxu0 0
    %1816 = vmatpush1.bf16.msra.mxu0 %v1426
    %1817 = vmatprep.subr.bf16.mxu0 0
    %1818 = vmatpush1.bf16.msra.mxu0 %v1427
    %1819 = vmatprep.subr.bf16.mxu0 0
    %1820 = vmatpush1.bf16.msra.mxu0 %v1428
    %1821 = vmatprep.subr.bf16.mxu0 0
    %1822 = vmatpush1.bf16.msra.mxu0 %v1429
    %1823 = vmatprep.subr.bf16.mxu0 0
    %1824 = vmatpush1.bf16.msra.mxu0 %v1430
    %1825 = vmatprep.subr.bf16.mxu0 0
    %1826 = vmatpush1.bf16.msra.mxu0 %v1431
    %1827 = vmatprep.subr.bf16.mxu0 0
    %1828 = vmatpush1.bf16.msra.mxu0 %v1432
    %1829 = vmatprep.subr.bf16.mxu0 0
    %1830 = vmatpush1.bf16.msra.mxu0 %v1433
    %1831 = vmatprep.subr.bf16.mxu0 0
    %1832 = vmatpush1.bf16.msra.mxu0 %v1434
    %1833 = vmatprep.subr.bf16.mxu0 0
    %1834 = vmatpush1.bf16.msra.mxu0 %v1435
    %1835 = vmatprep.subr.bf16.mxu0 0
    %1836 = vmatpush1.bf16.msra.mxu0 %v1436
    %1837 = vmatprep.mubr.bf16.mxu0 %v239
    %1838 = vmatmul.mubr.bf16.gmra.mrb[0].mxu0 %v238
    %v1839 = vpop.f32.mrb[0].mxu0
    %v1840 = vadd.f32 %v651, %v1839
    %v1841 = vpop.f32.mrb[0].mxu0
    %v1842 = vpop.f32.mrb[0].mxu0
    %v1843 = vpop.f32.mrb[0].mxu0
    %1844 = vdwg.mxu0
    %1845 = vmatprep.subr.bf16.mxu0 0
    %1846 = vmatpush1.bf16.msra.mxu0 %v1437
    %1847 = vmatprep.subr.bf16.mxu0 0
    %1848 = vmatpush1.bf16.msra.mxu0 %v1438
    %1849 = vmatprep.subr.bf16.mxu0 0
    %1850 = vmatpush1.bf16.msra.mxu0 %v1439
    %1851 = vmatprep.subr.bf16.mxu0 0
    %1852 = vmatpush1.bf16.msra.mxu0 %v1440
    %1853 = vmatprep.subr.bf16.mxu0 0
    %1854 = vmatpush1.bf16.msra.mxu0 %v1441
    %1855 = vmatprep.subr.bf16.mxu0 0
    %1856 = vmatpush1.bf16.msra.mxu0 %v1442
    %1857 = vmatprep.subr.bf16.mxu0 0
    %1858 = vmatpush1.bf16.msra.mxu0 %v1443
    %1859 = vmatprep.subr.bf16.mxu0 0
    %1860 = vmatpush1.bf16.msra.mxu0 %v1444
    %1861 = vmatprep.subr.bf16.mxu0 0
    %1862 = vmatpush1.bf16.msra.mxu0 %v1445
    %1863 = vmatprep.subr.bf16.mxu0 0
    %1864 = vmatpush1.bf16.msra.mxu0 %v1446
    %1865 = vmatprep.subr.bf16.mxu0 0
    %1866 = vmatpush1.bf16.msra.mxu0 %v1447
    %1867 = vmatprep.subr.bf16.mxu0 0
    %1868 = vmatpush1.bf16.msra.mxu0 %v1448
    %1869 = vmatprep.subr.bf16.mxu0 0
    %1870 = vmatpush1.bf16.msra.mxu0 %v1449
    %1871 = vmatprep.subr.bf16.mxu0 0
    %1872 = vmatpush1.bf16.msra.mxu0 %v1450
    %1873 = vmatprep.subr.bf16.mxu0 0
    %1874 = vmatpush1.bf16.msra.mxu0 %v1451
    %1875 = vmatprep.subr.bf16.mxu0 0
    %1876 = vmatpush1.bf16.msra.mxu0 %v1452
    %1877 = vmatprep.mubr.bf16.mxu0 %v241
    %1878 = vmatmul.mubr.bf16.gmra.mrb[0].mxu0 %v240
    %v1879 = vpop.f32.mrb[0].mxu0
    %v1880 = vadd.f32 %v1840, %v1879
    %v1881 = vpop.f32.mrb[0].mxu0
    %v1882 = vpop.f32.mrb[0].mxu0
    %v1883 = vpop.f32.mrb[0].mxu0
    %1884 = vdwg.mxu0
    %1885 = vmatprep.subr.bf16.mxu0 0
    %1886 = vmatpush1.bf16.msra.mxu0 %v1453
    %1887 = vmatprep.subr.bf16.mxu0 0
    %1888 = vmatpush1.bf16.msra.mxu0 %v1454
    %1889 = vmatprep.subr.bf16.mxu0 0
    %1890 = vmatpush1.bf16.msra.mxu0 %v1455
    %1891 = vmatprep.subr.bf16.mxu0 0
    %1892 = vmatpush1.bf16.msra.mxu0 %v1456
    %1893 = vmatprep.subr.bf16.mxu0 0
    %1894 = vmatpush1.bf16.msra.mxu0 %v1457
    %1895 = vmatprep.subr.bf16.mxu0 0
    %1896 = vmatpush1.bf16.msra.mxu0 %v1458
    %1897 = vmatprep.subr.bf16.mxu0 0
    %1898 = vmatpush1.bf16.msra.mxu0 %v1459
    %1899 = vmatprep.subr.bf16.mxu0 0
    %1900 = vmatpush1.bf16.msra.mxu0 %v1460
    %1901 = vmatprep.subr.bf16.mxu0 0
    %1902 = vmatpush1.bf16.msra.mxu0 %v1461
    %1903 = vmatprep.subr.bf16.mxu0 0
    %1904 = vmatpush1.bf16.msra.mxu0 %v1462
    %1905 = vmatprep.subr.bf16.mxu0 0
    %1906 = vmatpush1.bf16.msra.mxu0 %v1463
    %1907 = vmatprep.subr.bf16.mxu0 0
    %1908 = vmatpush1.bf16.msra.mxu0 %v1464
    %1909 = vmatprep.subr.bf16.mxu0 0
    %1910 = vmatpush1.bf16.msra.mxu0 %v1465
    %1911 = vmatprep.subr.bf16.mxu0 0
    %1912 = vmatpush1.bf16.msra.mxu0 %v1466
    %1913 = vmatprep.subr.bf16.mxu0 0
    %1914 = vmatpush1.bf16.msra.mxu0 %v1467
    %1915 = vmatprep.subr.bf16.mxu0 0
    %1916 = vmatpush1.bf16.msra.mxu0 %v1468
    %1917 = vmatprep.mubr.bf16.mxu0 %v243
    %1918 = vmatmul.mubr.bf16.gmra.mrb[0].mxu0 %v242
    %v1919 = vpop.f32.mrb[0].mxu0
    %v1920 = vadd.f32 %v1880, %v1919
    %v1921 = vpop.f32.mrb[0].mxu0
    %v1922 = vpop.f32.mrb[0].mxu0
    %v1923 = vpop.f32.mrb[0].mxu0
    %1924 = vdwg.mxu0
    %1925 = vmatprep.subr.bf16.mxu0 0
    %1926 = vmatpush1.bf16.msra.mxu0 %v1469
    %1927 = vmatprep.subr.bf16.mxu0 0
    %1928 = vmatpush1.bf16.msra.mxu0 %v1470
    %1929 = vmatprep.subr.bf16.mxu0 0
    %1930 = vmatpush1.bf16.msra.mxu0 %v1471
    %1931 = vmatprep.subr.bf16.mxu0 0
    %1932 = vmatpush1.bf16.msra.mxu0 %v1472
    %1933 = vmatprep.subr.bf16.mxu0 0
    %1934 = vmatpush1.bf16.msra.mxu0 %v1473
    %1935 = vmatprep.subr.bf16.mxu0 0
    %1936 = vmatpush1.bf16.msra.mxu0 %v1474
    %1937 = vmatprep.subr.bf16.mxu0 0
    %1938 = vmatpush1.bf16.msra.mxu0 %v1475
    %1939 = vmatprep.subr.bf16.mxu0 0
    %1940 = vmatpush1.bf16.msra.mxu0 %v1476
    %1941 = vmatprep.subr.bf16.mxu0 0
    %1942 = vmatpush1.bf16.msra.mxu0 %v1477
    %1943 = vmatprep.subr.bf16.mxu0 0
    %1944 = vmatpush1.bf16.msra.mxu0 %v1478
    %1945 = vmatprep.subr.bf16.mxu0 0
    %1946 = vmatpush1.bf16.msra.mxu0 %v1479
    %1947 = vmatprep.subr.bf16.mxu0 0
    %1948 = vmatpush1.bf16.msra.mxu0 %v1480
    %1949 = vmatprep.subr.bf16.mxu0 0
    %1950 = vmatpush1.bf16.msra.mxu0 %v1481
    %1951 = vmatprep.subr.bf16.mxu0 0
    %1952 = vmatpush1.bf16.msra.mxu0 %v1482
    %1953 = vmatprep.subr.bf16.mxu0 0
    %1954 = vmatpush1.bf16.msra.mxu0 %v1483
    %1955 = vmatprep.subr.bf16.mxu0 0
    %1956 = vmatpush1.bf16.msra.mxu0 %v1484
    %1957 = vmatprep.mubr.bf16.mxu0 %v245
    %1958 = vmatmul.mubr.bf16.gmra.mrb[0].mxu0 %v244
    %v1959 = vpop.f32.mrb[0].mxu0
    %v1960 = vadd.f32 %v1920, %v1959
    %v1961 = vpop.f32.mrb[0].mxu0
    %v1962 = vpop.f32.mrb[0].mxu0
    %v1963 = vpop.f32.mrb[0].mxu0
    %1964 = vdwg.mxu0
    %1965 = vmatprep.subr.bf16.mxu0 0
    %1966 = vmatpush1.bf16.msra.mxu0 %v1485
    %1967 = vmatprep.subr.bf16.mxu0 0
    %1968 = vmatpush1.bf16.msra.mxu0 %v1486
    %1969 = vmatprep.subr.bf16.mxu0 0
    %1970 = vmatpush1.bf16.msra.mxu0 %v1487
    %1971 = vmatprep.subr.bf16.mxu0 0
    %1972 = vmatpush1.bf16.msra.mxu0 %v1488
    %1973 = vmatprep.subr.bf16.mxu0 0
    %1974 = vmatpush1.bf16.msra.mxu0 %v1489
    %1975 = vmatprep.subr.bf16.mxu0 0
    %1976 = vmatpush1.bf16.msra.mxu0 %v1490
    %1977 = vmatprep.subr.bf16.mxu0 0
    %1978 = vmatpush1.bf16.msra.mxu0 %v1491
    %1979 = vmatprep.subr.bf16.mxu0 0
    %1980 = vmatpush1.bf16.msra.mxu0 %v1492
    %1981 = vmatprep.subr.bf16.mxu0 0
    %1982 = vmatpush1.bf16.msra.mxu0 %v1493
    %1983 = vmatprep.subr.bf16.mxu0 0
    %1984 = vmatpush1.bf16.msra.mxu0 %v1494
    %1985 = vmatprep.subr.bf16.mxu0 0
    %1986 = vmatpush1.bf16.msra.mxu0 %v1495
    %1987 = vmatprep.subr.bf16.mxu0 0
    %1988 = vmatpush1.bf16.msra.mxu0 %v1496
    %1989 = vmatprep.subr.bf16.mxu0 0
    %1990 = vmatpush1.bf16.msra.mxu0 %v1497
    %1991 = vmatprep.subr.bf16.mxu0 0
    %1992 = vmatpush1.bf16.msra.mxu0 %v1498
    %1993 = vmatprep.subr.bf16.mxu0 0
    %1994 = vmatpush1.bf16.msra.mxu0 %v1499
    %1995 = vmatprep.subr.bf16.mxu0 0
    %1996 = vmatpush1.bf16.msra.mxu0 %v1500
    %1997 = vmatprep.mubr.bf16.mxu0 %v247
    %1998 = vmatmul.mubr.bf16.gmra.mrb[0].mxu0 %v246
    %v1999 = vpop.f32.mrb[0].mxu0
    %v2000 = vadd.f32 %v1960, %v1999
    %v2001 = vpop.f32.mrb[0].mxu0
    %v2002 = vpop.f32.mrb[0].mxu0
    %v2003 = vpop.f32.mrb[0].mxu0
    %2004 = vdwg.mxu0
    %2005 = vmatprep.subr.bf16.mxu0 0
    %2006 = vmatpush1.bf16.msra.mxu0 %v1501
    %2007 = vmatprep.subr.bf16.mxu0 0
    %2008 = vmatpush1.bf16.msra.mxu0 %v1502
    %2009 = vmatprep.subr.bf16.mxu0 0
    %2010 = vmatpush1.bf16.msra.mxu0 %v1503
    %2011 = vmatprep.subr.bf16.mxu0 0
    %2012 = vmatpush1.bf16.msra.mxu0 %v1504
    %2013 = vmatprep.subr.bf16.mxu0 0
    %2014 = vmatpush1.bf16.msra.mxu0 %v1505
    %2015 = vmatprep.subr.bf16.mxu0 0
    %2016 = vmatpush1.bf16.msra.mxu0 %v1506
    %2017 = vmatprep.subr.bf16.mxu0 0
    %2018 = vmatpush1.bf16.msra.mxu0 %v1507
    %2019 = vmatprep.subr.bf16.mxu0 0
    %2020 = vmatpush1.bf16.msra.mxu0 %v1508
    %2021 = vmatprep.subr.bf16.mxu0 0
    %2022 = vmatpush1.bf16.msra.mxu0 %v1509
    %2023 = vmatprep.subr.bf16.mxu0 0
    %2024 = vmatpush1.bf16.msra.mxu0 %v1510
    %2025 = vmatprep.subr.bf16.mxu0 0
    %2026 = vmatpush1.bf16.msra.mxu0 %v1511
    %2027 = vmatprep.subr.bf16.mxu0 0
    %2028 = vmatpush1.bf16.msra.mxu0 %v1512
    %2029 = vmatprep.subr.bf16.mxu0 0
    %2030 = vmatpush1.bf16.msra.mxu0 %v1513
    %2031 = vmatprep.subr.bf16.mxu0 0
    %2032 = vmatpush1.bf16.msra.mxu0 %v1514
    %2033 = vmatprep.subr.bf16.mxu0 0
    %2034 = vmatpush1.bf16.msra.mxu0 %v1515
    %2035 = vmatprep.subr.bf16.mxu0 0
    %2036 = vmatpush1.bf16.msra.mxu0 %v1516
    %2037 = vmatprep.mubr.bf16.mxu0 %v249
    %2038 = vmatmul.mubr.bf16.gmra.mrb[0].mxu0 %v248
    %v2039 = vpop.f32.mrb[0].mxu0
    %v2040 = vadd.f32 %v2000, %v2039
    %v2041 = vpop.f32.mrb[0].mxu0
    %v2042 = vpop.f32.mrb[0].mxu0
    %v2043 = vpop.f32.mrb[0].mxu0
    %2044 = vdwg.mxu0
    %2045 = vmatprep.subr.bf16.mxu0 0
    %2046 = vmatpush1.bf16.msra.mxu0 %v1517
    %2047 = vmatprep.subr.bf16.mxu0 0
    %2048 = vmatpush1.bf16.msra.mxu0 %v1518
    %2049 = vmatprep.subr.bf16.mxu0 0
    %2050 = vmatpush1.bf16.msra.mxu0 %v1519
    %2051 = vmatprep.subr.bf16.mxu0 0
    %2052 = vmatpush1.bf16.msra.mxu0 %v1520
    %2053 = vmatprep.subr.bf16.mxu0 0
    %2054 = vmatpush1.bf16.msra.mxu0 %v1521
    %2055 = vmatprep.subr.bf16.mxu0 0
    %2056 = vmatpush1.bf16.msra.mxu0 %v1522
    %2057 = vmatprep.subr.bf16.mxu0 0
    %2058 = vmatpush1.bf16.msra.mxu0 %v1523
    %2059 = vmatprep.subr.bf16.mxu0 0
    %2060 = vmatpush1.bf16.msra.mxu0 %v1524
    %2061 = vmatprep.subr.bf16.mxu0 0
    %2062 = vmatpush1.bf16.msra.mxu0 %v1525
    %2063 = vmatprep.subr.bf16.mxu0 0
    %2064 = vmatpush1.bf16.msra.mxu0 %v1526
    %2065 = vmatprep.subr.bf16.mxu0 0
    %2066 = vmatpush1.bf16.msra.mxu0 %v1527
    %2067 = vmatprep.subr.bf16.mxu0 0
    %2068 = vmatpush1.bf16.msra.mxu0 %v1528
    %2069 = vmatprep.subr.bf16.mxu0 0
    %2070 = vmatpush1.bf16.msra.mxu0 %v1529
    %2071 = vmatprep.subr.bf16.mxu0 0
    %2072 = vmatpush1.bf16.msra.mxu0 %v1530
    %2073 = vmatprep.subr.bf16.mxu0 0
    %2074 = vmatpush1.bf16.msra.mxu0 %v1531
    %2075 = vmatprep.subr.bf16.mxu0 0
    %2076 = vmatpush1.bf16.msra.mxu0 %v1532
    %2077 = vmatprep.mubr.bf16.mxu0 %v251
    %2078 = vmatmul.mubr.bf16.gmra.mrb[0].mxu0 %v250
    %v2079 = vpop.f32.mrb[0].mxu0
    %v2080 = vadd.f32 %v2040, %v2079
    %v2081 = vpop.f32.mrb[0].mxu0
    %v2082 = vpop.f32.mrb[0].mxu0
    %v2083 = vpop.f32.mrb[0].mxu0
    %2084 = vdwg.mxu0
    %2085 = vmatprep.subr.bf16.mxu0 0
    %2086 = vmatpush1.bf16.msra.mxu0 %v1533
    %2087 = vmatprep.subr.bf16.mxu0 0
    %2088 = vmatpush1.bf16.msra.mxu0 %v1534
    %2089 = vmatprep.subr.bf16.mxu0 0
    %2090 = vmatpush1.bf16.msra.mxu0 %v1535
    %2091 = vmatprep.subr.bf16.mxu0 0
    %2092 = vmatpush1.bf16.msra.mxu0 %v1536
    %2093 = vmatprep.subr.bf16.mxu0 0
    %2094 = vmatpush1.bf16.msra.mxu0 %v1537
    %2095 = vmatprep.subr.bf16.mxu0 0
    %2096 = vmatpush1.bf16.msra.mxu0 %v1538
    %2097 = vmatprep.subr.bf16.mxu0 0
    %2098 = vmatpush1.bf16.msra.mxu0 %v1539
    %2099 = vmatprep.subr.bf16.mxu0 0
    %2100 = vmatpush1.bf16.msra.mxu0 %v1540
    %2101 = vmatprep.subr.bf16.mxu0 0
    %2102 = vmatpush1.bf16.msra.mxu0 %v1541
    %2103 = vmatprep.subr.bf16.mxu0 0
    %2104 = vmatpush1.bf16.msra.mxu0 %v1542
    %2105 = vmatprep.subr.bf16.mxu0 0
    %2106 = vmatpush1.bf16.msra.mxu0 %v1543
    %2107 = vmatprep.subr.bf16.mxu0 0
    %2108 = vmatpush1.bf16.msra.mxu0 %v1544
    %2109 = vmatprep.subr.bf16.mxu0 0
    %2110 = vmatpush1.bf16.msra.mxu0 %v1545
    %2111 = vmatprep.subr.bf16.mxu0 0
    %2112 = vmatpush1.bf16.msra.mxu0 %v1546
    %2113 = vmatprep.subr.bf16.mxu0 0
    %2114 = vmatpush1.bf16.msra.mxu0 %v1547
    %2115 = vmatprep.subr.bf16.mxu0 0
    %2116 = vmatpush1.bf16.msra.mxu0 %v1548
    %2117 = vmatprep.mubr.bf16.mxu0 %v253
    %2118 = vmatmul.mubr.bf16.gmra.mrb[0].mxu0 %v252
    %v2119 = vpop.f32.mrb[0].mxu0
    %v2120 = vadd.f32 %v2080, %v2119
    %v2121 = vpop.f32.mrb[0].mxu0
    %v2122 = vpop.f32.mrb[0].mxu0
    %v2123 = vpop.f32.mrb[0].mxu0
    %2124 = vdwg.mxu0
    %2125 = vmatprep.subr.bf16.mxu0 0
    %2126 = vmatpush1.bf16.msra.mxu0 %v1549
    %2127 = vmatprep.subr.bf16.mxu0 0
    %2128 = vmatpush1.bf16.msra.mxu0 %v1550
    %2129 = vmatprep.subr.bf16.mxu0 0
    %2130 = vmatpush1.bf16.msra.mxu0 %v1551
    %2131 = vmatprep.subr.bf16.mxu0 0
    %2132 = vmatpush1.bf16.msra.mxu0 %v1552
    %2133 = vmatprep.subr.bf16.mxu0 0
    %2134 = vmatpush1.bf16.msra.mxu0 %v1553
    %2135 = vmatprep.subr.bf16.mxu0 0
    %2136 = vmatpush1.bf16.msra.mxu0 %v1554
    %2137 = vmatprep.subr.bf16.mxu0 0
    %2138 = vmatpush1.bf16.msra.mxu0 %v1555
    %2139 = vmatprep.subr.bf16.mxu0 0
    %2140 = vmatpush1.bf16.msra.mxu0 %v1556
    %2141 = vmatprep.subr.bf16.mxu0 0
    %2142 = vmatpush1.bf16.msra.mxu0 %v1557
    %2143 = vmatprep.subr.bf16.mxu0 0
    %2144 = vmatpush1.bf16.msra.mxu0 %v1558
    %2145 = vmatprep.subr.bf16.mxu0 0
    %2146 = vmatpush1.bf16.msra.mxu0 %v1559
    %2147 = vmatprep.subr.bf16.mxu0 0
    %2148 = vmatpush1.bf16.msra.mxu0 %v1560
    %2149 = vmatprep.subr.bf16.mxu0 0
    %2150 = vmatpush1.bf16.msra.mxu0 %v1561
    %2151 = vmatprep.subr.bf16.mxu0 0
    %2152 = vmatpush1.bf16.msra.mxu0 %v1562
    %2153 = vmatprep.subr.bf16.mxu0 0
    %2154 = vmatpush1.bf16.msra.mxu0 %v1563
    %2155 = vmatprep.subr.bf16.mxu0 0
    %2156 = vmatpush1.bf16.msra.mxu0 %v1564
    %2157 = vmatprep.mubr.bf16.mxu0 %v255
    %2158 = vmatmul.mubr.bf16.gmra.mrb[0].mxu0 %v254
    %v2159 = vpop.f32.mrb[0].mxu0
    %v2160 = vadd.f32 %v2120, %v2159
    %v2161 = vpop.f32.mrb[0].mxu0
    %v2162 = vpop.f32.mrb[0].mxu0
    %v2163 = vpop.f32.mrb[0].mxu0
    %2164 = vdwg.mxu0
    %2165 = vmatprep.subr.bf16.mxu0 0
    %2166 = vmatpush1.bf16.msra.mxu0 %v1565
    %2167 = vmatprep.subr.bf16.mxu0 0
    %2168 = vmatpush1.bf16.msra.mxu0 %v1566
    %2169 = vmatprep.subr.bf16.mxu0 0
    %2170 = vmatpush1.bf16.msra.mxu0 %v1567
    %2171 = vmatprep.subr.bf16.mxu0 0
    %2172 = vmatpush1.bf16.msra.mxu0 %v1568
    %2173 = vmatprep.subr.bf16.mxu0 0
    %2174 = vmatpush1.bf16.msra.mxu0 %v1569
    %2175 = vmatprep.subr.bf16.mxu0 0
    %2176 = vmatpush1.bf16.msra.mxu0 %v1570
    %2177 = vmatprep.subr.bf16.mxu0 0
    %2178 = vmatpush1.bf16.msra.mxu0 %v1571
    %2179 = vmatprep.subr.bf16.mxu0 0
    %2180 = vmatpush1.bf16.msra.mxu0 %v1572
    %2181 = vmatprep.subr.bf16.mxu0 0
    %2182 = vmatpush1.bf16.msra.mxu0 %v1573
    %2183 = vmatprep.subr.bf16.mxu0 0
    %2184 = vmatpush1.bf16.msra.mxu0 %v1574
    %2185 = vmatprep.subr.bf16.mxu0 0
    %2186 = vmatpush1.bf16.msra.mxu0 %v1575
    %2187 = vmatprep.subr.bf16.mxu0 0
    %2188 = vmatpush1.bf16.msra.mxu0 %v1576
    %2189 = vmatprep.subr.bf16.mxu0 0
    %2190 = vmatpush1.bf16.msra.mxu0 %v1577
    %2191 = vmatprep.subr.bf16.mxu0 0
    %2192 = vmatpush1.bf16.msra.mxu0 %v1578
    %2193 = vmatprep.subr.bf16.mxu0 0
    %2194 = vmatpush1.bf16.msra.mxu0 %v1579
    %2195 = vmatprep.subr.bf16.mxu0 0
    %2196 = vmatpush1.bf16.msra.mxu0 %v1580
    %2197 = vmatprep.mubr.bf16.mxu0 %v257
    %2198 = vmatmul.mubr.bf16.gmra.mrb[0].mxu0 %v256
    %v2199 = vpop.f32.mrb[0].mxu0
    %v2200 = vadd.f32 %v2160, %v2199
    %v2201 = vpop.f32.mrb[0].mxu0
    %v2202 = vpop.f32.mrb[0].mxu0
    %v2203 = vpop.f32.mrb[0].mxu0
    %2204 = vdwg.mxu0
    %2205 = vmatprep.subr.bf16.mxu0 0
    %2206 = vmatpush1.bf16.msra.mxu0 %v1581
    %2207 = vmatprep.subr.bf16.mxu0 0
    %2208 = vmatpush1.bf16.msra.mxu0 %v1582
    %2209 = vmatprep.subr.bf16.mxu0 0
    %2210 = vmatpush1.bf16.msra.mxu0 %v1583
    %2211 = vmatprep.subr.bf16.mxu0 0
    %2212 = vmatpush1.bf16.msra.mxu0 %v1584
    %2213 = vmatprep.subr.bf16.mxu0 0
    %2214 = vmatpush1.bf16.msra.mxu0 %v1585
    %2215 = vmatprep.subr.bf16.mxu0 0
    %2216 = vmatpush1.bf16.msra.mxu0 %v1586
    %2217 = vmatprep.subr.bf16.mxu0 0
    %2218 = vmatpush1.bf16.msra.mxu0 %v1587
    %2219 = vmatprep.subr.bf16.mxu0 0
    %2220 = vmatpush1.bf16.msra.mxu0 %v1588
    %2221 = vmatprep.subr.bf16.mxu0 0
    %2222 = vmatpush1.bf16.msra.mxu0 %v1589
    %2223 = vmatprep.subr.bf16.mxu0 0
    %2224 = vmatpush1.bf16.msra.mxu0 %v1590
    %2225 = vmatprep.subr.bf16.mxu0 0
    %2226 = vmatpush1.bf16.msra.mxu0 %v1591
    %2227 = vmatprep.subr.bf16.mxu0 0
    %2228 = vmatpush1.bf16.msra.mxu0 %v1592
    %2229 = vmatprep.subr.bf16.mxu0 0
    %2230 = vmatpush1.bf16.msra.mxu0 %v1593
    %2231 = vmatprep.subr.bf16.mxu0 0
    %2232 = vmatpush1.bf16.msra.mxu0 %v1594
    %2233 = vmatprep.subr.bf16.mxu0 0
    %2234 = vmatpush1.bf16.msra.mxu0 %v1595
    %2235 = vmatprep.subr.bf16.mxu0 0
    %2236 = vmatpush1.bf16.msra.mxu0 %v1596
    %2237 = vmatprep.mubr.bf16.mxu0 %v259
    %2238 = vmatmul.mubr.bf16.gmra.mrb[0].mxu0 %v258
    %v2239 = vpop.f32.mrb[0].mxu0
    %v2240 = vadd.f32 %v2200, %v2239
    %v2241 = vpop.f32.mrb[0].mxu0
    %v2242 = vpop.f32.mrb[0].mxu0
    %v2243 = vpop.f32.mrb[0].mxu0
    %2244 = vdwg.mxu0
    %2245 = vmatprep.subr.bf16.mxu0 0
    %2246 = vmatpush1.bf16.msra.mxu0 %v1597
    %2247 = vmatprep.subr.bf16.mxu0 0
    %2248 = vmatpush1.bf16.msra.mxu0 %v1598
    %2249 = vmatprep.subr.bf16.mxu0 0
    %2250 = vmatpush1.bf16.msra.mxu0 %v1599
    %2251 = vmatprep.subr.bf16.mxu0 0
    %2252 = vmatpush1.bf16.msra.mxu0 %v1600
    %2253 = vmatprep.subr.bf16.mxu0 0
    %2254 = vmatpush1.bf16.msra.mxu0 %v1601
    %2255 = vmatprep.subr.bf16.mxu0 0
    %2256 = vmatpush1.bf16.msra.mxu0 %v1602
    %2257 = vmatprep.subr.bf16.mxu0 0
    %2258 = vmatpush1.bf16.msra.mxu0 %v1603
    %2259 = vmatprep.subr.bf16.mxu0 0
    %2260 = vmatpush1.bf16.msra.mxu0 %v1604
    %2261 = vmatprep.subr.bf16.mxu0 0
    %2262 = vmatpush1.bf16.msra.mxu0 %v1605
    %2263 = vmatprep.subr.bf16.mxu0 0
    %2264 = vmatpush1.bf16.msra.mxu0 %v1606
    %2265 = vmatprep.subr.bf16.mxu0 0
    %2266 = vmatpush1.bf16.msra.mxu0 %v1607
    %2267 = vmatprep.subr.bf16.mxu0 0
    %2268 = vmatpush1.bf16.msra.mxu0 %v1608
    %2269 = vmatprep.subr.bf16.mxu0 0
    %2270 = vmatpush1.bf16.msra.mxu0 %v1609
    %2271 = vmatprep.subr.bf16.mxu0 0
    %2272 = vmatpush1.bf16.msra.mxu0 %v1610
    %2273 = vmatprep.subr.bf16.mxu0 0
    %2274 = vmatpush1.bf16.msra.mxu0 %v1611
    %2275 = vmatprep.subr.bf16.mxu0 0
    %2276 = vmatpush1.bf16.msra.mxu0 %v1612
    %2277 = vmatprep.mubr.bf16.mxu0 %v261
    %2278 = vmatmul.mubr.bf16.gmra.mrb[0].mxu0 %v260
    %v2279 = vpop.f32.mrb[0].mxu0
    %v2280 = vadd.f32 %v2240, %v2279
    %v2281 = vpop.f32.mrb[0].mxu0
    %v2282 = vpop.f32.mrb[0].mxu0
    %v2283 = vpop.f32.mrb[0].mxu0
    %2284 = vdwg.mxu0
    %v2285 = vmax.f32 %v2280, 0.0
    %v2286 = vpack.c.bf16 %v2285, %v2285
    %v2287 = vld [vmem:[#allocation7] sm:$0xf]
    %v2288 = vld [vmem:[#allocation7 + $0x4] sm:$0xf]
    %v2289 = vld [vmem:[#allocation7 + $0x8] sm:$0xf]
    %v2290 = vld [vmem:[#allocation7 + $0xc] sm:$0xf]
    %v2291 = vld [vmem:[#allocation7 + $0x10] sm:$0xf]
    %v2292 = vld [vmem:[#allocation7 + $0x14] sm:$0xf]
    %v2293 = vld [vmem:[#allocation7 + $0x18] sm:$0xf]
    %v2294 = vld [vmem:[#allocation7 + $0x1c] sm:$0xf]
    %v2295 = vld [vmem:[#allocation7 + $0x20] sm:$0xf]
    %v2296 = vld [vmem:[#allocation7 + $0x24] sm:$0xf]
    %v2297 = vld [vmem:[#allocation7 + $0x28] sm:$0xf]
    %v2298 = vld [vmem:[#allocation7 + $0x2c] sm:$0xf]
    %v2299 = vld [vmem:[#allocation7 + $0x30] sm:$0xf]
    %v2300 = vld [vmem:[#allocation7 + $0x34] sm:$0xf]
    %v2301 = vld [vmem:[#allocation7 + $0x38] sm:$0xf]
    %v2302 = vld [vmem:[#allocation7 + $0x3c] sm:$0xf]
    %v2303 = vld [vmem:[%s4] sm:$0x1]
    %v2305 = vlaneseq
    %v2306 = vshrl.u32 %v2305, 7
    %v2307 = vsub.s32 0, %v2306
    %v2308 = vrot.slane %v2303, %v2307
    %v2326 = vunpack.c.l.b16 %v2287
    %v2327 = vunpack.c.l.b16 %v2288
    %v2328 = vunpack.c.l.b16 %v2289
    %v2329 = vunpack.c.l.b16 %v2290
    %v2330 = vunpack.c.l.b16 %v2291
    %v2331 = vunpack.c.l.b16 %v2292
    %v2332 = vunpack.c.l.b16 %v2293
    %v2333 = vunpack.c.l.b16 %v2294
    %v2334 = vunpack.c.l.b16 %v2295
    %v2335 = vunpack.c.l.b16 %v2296
    %v2336 = vunpack.c.l.b16 %v2297
    %v2337 = vunpack.c.l.b16 %v2298
    %v2338 = vunpack.c.l.b16 %v2299
    %v2339 = vunpack.c.l.b16 %v2300
    %v2340 = vunpack.c.l.b16 %v2301
    %v2341 = vunpack.c.l.b16 %v2302
    %v2342 = vpack.c.b16 %v2327, %v2326
    %v2343 = vpack.c.b16 %v2329, %v2328
    %v2344 = vpack.c.b16 %v2331, %v2330
    %v2345 = vpack.c.b16 %v2333, %v2332
    %v2346 = vpack.c.b16 %v2335, %v2334
    %v2347 = vpack.c.b16 %v2337, %v2336
    %v2348 = vpack.c.b16 %v2339, %v2338
    %v2349 = vpack.c.b16 %v2341, %v2340
    %2358 = vmatprep.subr.bf16.mxu0 0
    %2359 = vmatpush1.bf16.msra.mxu0 %v2342
    %2360 = vmatprep.subr.bf16.mxu0 0
    %2361 = vmatpush1.bf16.msra.mxu0 %v2343
    %2362 = vmatprep.subr.bf16.mxu0 0
    %2363 = vmatpush1.bf16.msra.mxu0 %v2344
    %2364 = vmatprep.subr.bf16.mxu0 0
    %2365 = vmatpush1.bf16.msra.mxu0 %v2345
    %2366 = vmatprep.subr.bf16.mxu0 0
    %2367 = vmatpush1.bf16.msra.mxu0 %v2346
    %2368 = vmatprep.subr.bf16.mxu0 0
    %2369 = vmatpush1.bf16.msra.mxu0 %v2347
    %2370 = vmatprep.subr.bf16.mxu0 0
    %2371 = vmatpush1.bf16.msra.mxu0 %v2348
    %2372 = vmatprep.subr.bf16.mxu0 0
    %2373 = vmatpush1.bf16.msra.mxu0 %v2349
    %2374 = vmatprep.subr.bf16.mxu0 0
    %2375 = vmatpush1.bf16.msra.mxu0 0
    %2376 = vmatprep.subr.bf16.mxu0 0
    %2377 = vmatpush1.bf16.msra.mxu0 0
    %2378 = vmatprep.subr.bf16.mxu0 0
    %2379 = vmatpush1.bf16.msra.mxu0 0
    %2380 = vmatprep.subr.bf16.mxu0 0
    %2381 = vmatpush1.bf16.msra.mxu0 0
    %2382 = vmatprep.subr.bf16.mxu0 0
    %2383 = vmatpush1.bf16.msra.mxu0 0
    %2384 = vmatprep.subr.bf16.mxu0 0
    %2385 = vmatpush1.bf16.msra.mxu0 0
    %2386 = vmatprep.subr.bf16.mxu0 0
    %2387 = vmatpush1.bf16.msra.mxu0 0
    %2388 = vmatprep.subr.bf16.mxu0 0
    %2389 = vmatpush1.bf16.msra.mxu0 0
    %2390 = vmatprep.mubr.bf16.mxu0 0
    %2391 = vmatmul.mubr.bf16.gmra.mrb[0].mxu0 %v2286
    %v2392 = vpop.f32.mrb[0].mxu0
    %v2393 = vadd.f32 %v2308, %v2392
    %v2394 = vpop.f32.mrb[0].mxu0
    %v2395 = vpop.f32.mrb[0].mxu0
    %v2396 = vpop.f32.mrb[0].mxu0
    %2397 = vdwg.mxu0
    %v2398 = vmax.f32 %v2393, 0.0
    %v2399 = vpack.c.bf16 %v2398, %v2398
    %v2400 = vld [vmem:[#allocation8] sm:$0xf]
    %v2401 = vld [vmem:[#allocation8 + $0x4] sm:$0xf]
    %v2402 = vld [vmem:[#allocation8 + $0x8] sm:$0xf]
    %v2403 = vld [vmem:[#allocation8 + $0xc] sm:$0xf]
    %v2404 = vld [vmem:[#allocation8 + $0x10] sm:$0xf]
    %v2405 = vld [vmem:[#allocation8 + $0x14] sm:$0xf]
    %v2406 = vld [vmem:[#allocation8 + $0x18] sm:$0xf]
    %v2407 = vld [vmem:[#allocation8 + $0x1c] sm:$0xf]
    %v2408 = vld [vmem:[#allocation8 + $0x20] sm:$0xf]
    %v2409 = vld [vmem:[#allocation8 + $0x24] sm:$0xf]
    %v2410 = vld [vmem:[#allocation8 + $0x28] sm:$0xf]
    %v2411 = vld [vmem:[#allocation8 + $0x2c] sm:$0xf]
    %v2412 = vld [vmem:[#allocation8 + $0x30] sm:$0xf]
    %v2413 = vld [vmem:[#allocation8 + $0x34] sm:$0xf]
    %v2414 = vld [vmem:[#allocation8 + $0x38] sm:$0xf]
    %v2415 = vld [vmem:[#allocation8 + $0x3c] sm:$0xf]
    %v2416 = vld [vmem:[%s6] sm:$0x1]
    %v2418 = vlaneseq
    %v2419 = vshrl.u32 %v2418, 7
    %v2420 = vsub.s32 0, %v2419
    %v2421 = vrot.slane %v2416, %v2420
    %v2439 = vunpack.c.l.b16 %v2400
    %v2440 = vunpack.c.l.b16 %v2401
    %v2441 = vunpack.c.l.b16 %v2402
    %v2442 = vunpack.c.l.b16 %v2403
    %v2443 = vunpack.c.l.b16 %v2404
    %v2444 = vunpack.c.l.b16 %v2405
    %v2445 = vunpack.c.l.b16 %v2406
    %v2446 = vunpack.c.l.b16 %v2407
    %v2447 = vunpack.c.l.b16 %v2408
    %v2448 = vunpack.c.l.b16 %v2409
    %v2449 = vunpack.c.l.b16 %v2410
    %v2450 = vunpack.c.l.b16 %v2411
    %v2451 = vunpack.c.l.b16 %v2412
    %v2452 = vunpack.c.l.b16 %v2413
    %v2453 = vunpack.c.l.b16 %v2414
    %v2454 = vunpack.c.l.b16 %v2415
    %v2455 = vpack.c.b16 %v2440, %v2439
    %v2456 = vpack.c.b16 %v2442, %v2441
    %v2457 = vpack.c.b16 %v2444, %v2443
    %v2458 = vpack.c.b16 %v2446, %v2445
    %v2459 = vpack.c.b16 %v2448, %v2447
    %v2460 = vpack.c.b16 %v2450, %v2449
    %v2461 = vpack.c.b16 %v2452, %v2451
    %v2462 = vpack.c.b16 %v2454, %v2453
    %2471 = vmatprep.subr.bf16.mxu0 0
    %2472 = vmatpush1.bf16.msra.mxu0 %v2455
    %2473 = vmatprep.subr.bf16.mxu0 0
    %2474 = vmatpush1.bf16.msra.mxu0 %v2456
    %2475 = vmatprep.subr.bf16.mxu0 0
    %2476 = vmatpush1.bf16.msra.mxu0 %v2457
    %2477 = vmatprep.subr.bf16.mxu0 0
    %2478 = vmatpush1.bf16.msra.mxu0 %v2458
    %2479 = vmatprep.subr.bf16.mxu0 0
    %2480 = vmatpush1.bf16.msra.mxu0 %v2459
    %2481 = vmatprep.subr.bf16.mxu0 0
    %2482 = vmatpush1.bf16.msra.mxu0 %v2460
    %2483 = vmatprep.subr.bf16.mxu0 0
    %2484 = vmatpush1.bf16.msra.mxu0 %v2461
    %2485 = vmatprep.subr.bf16.mxu0 0
    %2486 = vmatpush1.bf16.msra.mxu0 %v2462
    %2487 = vmatprep.subr.bf16.mxu0 0
    %2488 = vmatpush1.bf16.msra.mxu0 0
    %2489 = vmatprep.subr.bf16.mxu0 0
    %2490 = vmatpush1.bf16.msra.mxu0 0
    %2491 = vmatprep.subr.bf16.mxu0 0
    %2492 = vmatpush1.bf16.msra.mxu0 0
    %2493 = vmatprep.subr.bf16.mxu0 0
    %2494 = vmatpush1.bf16.msra.mxu0 0
    %2495 = vmatprep.subr.bf16.mxu0 0
    %2496 = vmatpush1.bf16.msra.mxu0 0
    %2497 = vmatprep.subr.bf16.mxu0 0
    %2498 = vmatpush1.bf16.msra.mxu0 0
    %2499 = vmatprep.subr.bf16.mxu0 0
    %2500 = vmatpush1.bf16.msra.mxu0 0
    %2501 = vmatprep.subr.bf16.mxu0 0
    %2502 = vmatpush1.bf16.msra.mxu0 0
    %2503 = vmatprep.mubr.bf16.mxu0 0
    %2504 = vmatmul.mubr.bf16.gmra.mrb[0].mxu0 %v2399
    %v2505 = vpop.f32.mrb[0].mxu0
    %v2506 = vadd.f32 %v2421, %v2505
    %v2507 = vpop.f32.mrb[0].mxu0
    %v2508 = vpop.f32.mrb[0].mxu0
    %v2509 = vpop.f32.mrb[0].mxu0
    %2510 = vdwg.mxu0
    %v2511 = vmax.f32 %v2506, 0.0
    %v2512 = vpack.c.bf16 %v2511, %v2511
    %v2513 = vld [vmem:[#allocation10] sm:$0xf]
    %v2514 = vld [vmem:[#allocation10 + $0x4] sm:$0xf]
    %v2515 = vld [vmem:[#allocation10 + $0x8] sm:$0xf]
    %v2516 = vld [vmem:[#allocation10 + $0xc] sm:$0xf]
    %v2517 = vld [vmem:[#allocation10 + $0x10] sm:$0xf]
    %v2518 = vld [vmem:[#allocation10 + $0x14] sm:$0xf]
    %v2519 = vld [vmem:[#allocation10 + $0x18] sm:$0xf]
    %v2520 = vld [vmem:[#allocation10 + $0x1c] sm:$0xf]
    %v2521 = vld [vmem:[#allocation10 + $0x20] sm:$0xf]
    %v2522 = vld [vmem:[#allocation10 + $0x24] sm:$0xf]
    %v2523 = vld [vmem:[#allocation10 + $0x28] sm:$0xf]
    %v2524 = vld [vmem:[#allocation10 + $0x2c] sm:$0xf]
    %v2525 = vld [vmem:[#allocation10 + $0x30] sm:$0xf]
    %v2526 = vld [vmem:[#allocation10 + $0x34] sm:$0xf]
    %v2527 = vld [vmem:[#allocation10 + $0x38] sm:$0xf]
    %v2528 = vld [vmem:[#allocation10 + $0x3c] sm:$0xf]
    %v2529 = vld [vmem:[%s8] sm:$0x1]
    %v2531 = vlaneseq
    %v2532 = vshrl.u32 %v2531, 7
    %v2533 = vsub.s32 0, %v2532
    %v2534 = vrot.slane %v2529, %v2533
    %v2552 = vunpack.c.l.b16 %v2513
    %v2553 = vunpack.c.l.b16 %v2514
    %v2554 = vunpack.c.l.b16 %v2515
    %v2555 = vunpack.c.l.b16 %v2516
    %v2556 = vunpack.c.l.b16 %v2517
    %v2557 = vunpack.c.l.b16 %v2518
    %v2558 = vunpack.c.l.b16 %v2519
    %v2559 = vunpack.c.l.b16 %v2520
    %v2560 = vunpack.c.l.b16 %v2521
    %v2561 = vunpack.c.l.b16 %v2522
    %v2562 = vunpack.c.l.b16 %v2523
    %v2563 = vunpack.c.l.b16 %v2524
    %v2564 = vunpack.c.l.b16 %v2525
    %v2565 = vunpack.c.l.b16 %v2526
    %v2566 = vunpack.c.l.b16 %v2527
    %v2567 = vunpack.c.l.b16 %v2528
    %v2568 = vpack.c.b16 %v2553, %v2552
    %v2569 = vpack.c.b16 %v2555, %v2554
    %v2570 = vpack.c.b16 %v2557, %v2556
    %v2571 = vpack.c.b16 %v2559, %v2558
    %v2572 = vpack.c.b16 %v2561, %v2560
    %v2573 = vpack.c.b16 %v2563, %v2562
    %v2574 = vpack.c.b16 %v2565, %v2564
    %v2575 = vpack.c.b16 %v2567, %v2566
    %2584 = vmatprep.subr.bf16.mxu0 0
    %2585 = vmatpush1.bf16.msra.mxu0 %v2568
    %2586 = vmatprep.subr.bf16.mxu0 0
    %2587 = vmatpush1.bf16.msra.mxu0 %v2569
    %2588 = vmatprep.subr.bf16.mxu0 0
    %2589 = vmatpush1.bf16.msra.mxu0 %v2570
    %2590 = vmatprep.subr.bf16.mxu0 0
    %2591 = vmatpush1.bf16.msra.mxu0 %v2571
    %2592 = vmatprep.subr.bf16.mxu0 0
    %2593 = vmatpush1.bf16.msra.mxu0 %v2572
    %2594 = vmatprep.subr.bf16.mxu0 0
    %2595 = vmatpush1.bf16.msra.mxu0 %v2573
    %2596 = vmatprep.subr.bf16.mxu0 0
    %2597 = vmatpush1.bf16.msra.mxu0 %v2574
    %2598 = vmatprep.subr.bf16.mxu0 0
    %2599 = vmatpush1.bf16.msra.mxu0 %v2575
    %2600 = vmatprep.subr.bf16.mxu0 0
    %2601 = vmatpush1.bf16.msra.mxu0 0
    %2602 = vmatprep.subr.bf16.mxu0 0
    %2603 = vmatpush1.bf16.msra.mxu0 0
    %2604 = vmatprep.subr.bf16.mxu0 0
    %2605 = vmatpush1.bf16.msra.mxu0 0
    %2606 = vmatprep.subr.bf16.mxu0 0
    %2607 = vmatpush1.bf16.msra.mxu0 0
    %2608 = vmatprep.subr.bf16.mxu0 0
    %2609 = vmatpush1.bf16.msra.mxu0 0
    %2610 = vmatprep.subr.bf16.mxu0 0
    %2611 = vmatpush1.bf16.msra.mxu0 0
    %2612 = vmatprep.subr.bf16.mxu0 0
    %2613 = vmatpush1.bf16.msra.mxu0 0
    %2614 = vmatprep.subr.bf16.mxu0 0
    %2615 = vmatpush1.bf16.msra.mxu0 0
    %2616 = vmatprep.mubr.bf16.mxu0 0
    %2617 = vmatmul.mubr.bf16.gmra.mrb[0].mxu0 %v2512
    %v2618 = vpop.f32.mrb[0].mxu0
    %v2619 = vadd.f32 %v2534, %v2618
    %v2620 = vpop.f32.mrb[0].mxu0
    %v2621 = vpop.f32.mrb[0].mxu0
    %v2622 = vpop.f32.mrb[0].mxu0
    %2623 = vdwg.mxu0
    %2624 = vst [vmem:[#allocation11] sm:$0x3] %v2619
    // Predicated region
    $region58: #{tpu_custom_call.1} parent=1 // pred_check
      _
    $region59: #{tpu_custom_call.1} parent=1 // pred_check_branch
      %2626 = sbr.rel (0) target = $region61
    $region60: #{tpu_custom_call.1} parent=1 // pred_region
      %s2628 = ssub.s32 32, 32
      %2629 = vsyncadd [#allocation4], %s2628
      %s2631 = sshll.u32 [#allocation11], 4
      %s2632 = int_to_ptr.vmem [resolvable:$true] %s2631
      %2634 = dma.vmem_to_hbm [thread:$0]  %s2632, 32, %s9, [#allocation4]
    $region61: #{tpu_custom_call.1} parent=1 // pred_fallthru
      _
    // Predicated region
    $region62: #{tpu_custom_call.1} parent=1 // pred_check
      _
    $region63: #{tpu_custom_call.1} parent=1 // pred_check_branch
      %2636 = sbr.rel (0) target = $region65
    $region64: #{tpu_custom_call.1} parent=1 // pred_region
      %2637 = dma.done [#allocation4], 32
    $region65: #{tpu_custom_call.1} parent=1 // pred_fallthru
      _
    %2638 = vsyncpa [#allocation3], 1
    %2639 = vsyncpa [#allocation6], 1
    %2640 = vsyncpa [#allocation9], 1
    %2641 = vsyncpa [#allocation4], 1

</llo_original>
